<compile_context>
chip_gen: v7x
topology: tpu7x:2x2x1
jax: 0.10.0
libtpu: 0.0.40
codegen_flags: <defaults>
</compile_context>

<pallas_src>
import jax
import jax.numpy as jnp
from jax.experimental import pallas as pl
from jax.experimental.pallas import tpu as pltpu

LANE = 128     # TPU vreg lane width
SUBLANE = 8    # TPU vreg sublane count
SLAB = 128     # width of packed scalar-output slab


def _round_up(n, m):
    return ((n + m - 1) // m) * m


def _pad2(a, rows, cols):
    return jnp.pad(a, ((0, rows - a.shape[0]), (0, cols - a.shape[1])))


def _pack_gate_w(w, in_pad, h_pad):
    """(in_dim, 4*H) PyTorch-order gate weights -> (in_pad, 4*h_pad), lane-aligned gates."""
    in_dim, four_h = w.shape
    h = four_h // 4
    w = w.reshape(in_dim, 4, h)
    w = jnp.pad(w, ((0, in_pad - in_dim), (0, 0), (0, h_pad - h)))
    return w.reshape(in_pad, 4 * h_pad)


def _pack_gate_b(b_ih, b_hh, h_pad):
    """Fold the two LSTM biases and pad each gate block to h_pad lanes."""
    b = (b_ih + b_hh).reshape(4, -1)
    h = b.shape[-1]
    b = jnp.pad(b, ((0, 0), (0, h_pad - h)))
    return b.reshape(1, 4 * h_pad)


def _make_kernel(num_actions, dot_dtype):
    A = num_actions

    def kernel(x_ref, h_ref, c_ref, gumbel_ref,
               w_enc_ref, b_enc_ref,
               w_ih_ref, w_hh_ref, b_gate_ref,
               w_head_ref, b_head_ref,
               scalars_ref, h_out_ref, c_out_ref):
        f32 = jnp.float32
        x = x_ref[...]
        h = h_ref[...]
        c = c_ref[...]

        # --- encoder: relu(x @ W_enc + b_enc) ---
        enc = jnp.dot(x.astype(dot_dtype), w_enc_ref[...],
                      preferred_element_type=f32) + b_enc_ref[...]
        enc = jnp.maximum(enc, 0.0)

        # --- LSTM cell (PyTorch gate order i, f, g, o); gate slices lane-aligned ---
        Hp = h.shape[-1]
        gates = (
            jnp.dot(enc.astype(dot_dtype), w_ih_ref[...], preferred_element_type=f32)
            + jnp.dot(h.astype(dot_dtype), w_hh_ref[...], preferred_element_type=f32)
            + b_gate_ref[...]
        )
        i = jax.nn.sigmoid(gates[:, 0 * Hp:1 * Hp])
        f = jax.nn.sigmoid(gates[:, 1 * Hp:2 * Hp])
        g = jnp.tanh(gates[:, 2 * Hp:3 * Hp])
        o = jax.nn.sigmoid(gates[:, 3 * Hp:4 * Hp])
        c_new = f * c + i * g
        h_new = o * jnp.tanh(c_new)

        # --- fused actor+critic head: lanes [0,A) logits, lane A = value, rest pad ---
        head = jnp.dot(h_new.astype(dot_dtype), w_head_ref[...],
                       preferred_element_type=f32) + b_head_ref[...]
        col = jax.lax.broadcasted_iota(jnp.int32, head.shape, 1)
        NEG = jnp.float32(-1e30)
        logits = jnp.where(col < A, head, NEG)
        value = jnp.sum(jnp.where(col == A, head, 0.0), axis=-1, keepdims=True)

        # --- log-softmax reusing the exp; approx reciprocal for the denominator ---
        lmax = jnp.max(logits, axis=-1, keepdims=True)
        shifted = logits - lmax
        e = jnp.exp(shifted)
        s = jnp.sum(e, axis=-1, keepdims=True)
        probs = e * pl.reciprocal(s, approx=True)
        norm_logits = shifted - jnp.log(s)
        norm_logits = jnp.maximum(norm_logits, jnp.finfo(jnp.float32).min)  # torch clamp

        # --- categorical sample via Gumbel-max (min-index tie-break == torch argmax) ---
        z = logits + gumbel_ref[...]
        zmax = jnp.max(z, axis=-1, keepdims=True)
        action = jnp.min(jnp.where(z >= zmax, col, A), axis=-1, keepdims=True)  # int32

        # log-prob at sampled action via masked max (no one-hot multiply+sum)
        logprob = jnp.max(jnp.where(col == action, norm_logits, NEG),
                          axis=-1, keepdims=True)
        ent = -jnp.sum(probs * norm_logits, axis=-1, keepdims=True)

        # --- pack per-row scalars into one lane-dense slab ---
        scol = jax.lax.broadcasted_iota(jnp.int32, scalars_ref.shape, 1)
        slab = jnp.where(scol == 0, action.astype(f32),
               jnp.where(scol == 1, logprob,
               jnp.where(scol == 2, ent, value)))
        scalars_ref[...] = slab
        h_out_ref[...] = h_new
        c_out_ref[...] = c_new

    return kernel


def recurrent_policy_forward(x, state, params, gumbel, *, block_b=256,
                             dot_dtype=jnp.float32):
    """Mirrors RecurrentPolicy.forward -> (action, logprob, entropy, value, state)."""
    h, c = state
    B, OBS = x.shape
    _, H = h.shape
    A = gumbel.shape[-1]
    f32 = jnp.float32

    Hp = _round_up(H, LANE)
    HEADp = _round_up(A + 1, LANE)      # A logits + 1 value lane, padded to 128 lanes
    OBSp = _round_up(OBS, SUBLANE)

    bt = _round_up(min(block_b, _round_up(B, SUBLANE)), SUBLANE)
    Bp = _round_up(B, bt)
    grid = (Bp // bt,)

    # --- pad activations / state / noise (zero padding is exact for this stack) ---
    xp = _pad2(x.astype(f32), Bp, OBSp)
    hp = _pad2(h.astype(f32), Bp, Hp)
    cp = _pad2(c.astype(f32), Bp, Hp)
    gp = _pad2(gumbel.astype(f32), Bp, HEADp)

    # --- pack & pad weights (hoist out of the rollout loop in real use) ---
    w_enc = _pad2(params["w_enc"], OBSp, Hp).astype(dot_dtype)
    b_enc = _pad2(params["b_enc"].reshape(1, -1), 1, Hp).astype(f32)
    w_ih = _pack_gate_w(params["w_ih"], Hp, Hp).astype(dot_dtype)
    w_hh = _pack_gate_w(params["w_hh"], Hp, Hp).astype(dot_dtype)
    b_gate = _pack_gate_b(params["b_ih"], params["b_hh"], Hp).astype(f32)
    w_head = _pad2(jnp.concatenate([params["w_act"], params["w_val"]], axis=1),
                   Hp, HEADp).astype(dot_dtype)
    b_head = _pad2(jnp.concatenate([params["b_act"], params["b_val"]]).reshape(1, -1),
                   1, HEADp).astype(f32)

    inputs = (xp, hp, cp, gp, w_enc, b_enc, w_ih, w_hh, b_gate, w_head, b_head)

    def row_spec(shape):
        return pl.BlockSpec(shape, lambda i: (i, 0))

    def resident_spec(shape):
        return pl.BlockSpec(shape, lambda i: (0, 0))   # constant index -> stays in VMEM

    in_specs = [
        row_spec((bt, OBSp)), row_spec((bt, Hp)), row_spec((bt, Hp)), row_spec((bt, HEADp)),
        resident_spec((OBSp, Hp)), resident_spec((1, Hp)),
        resident_spec((Hp, 4 * Hp)), resident_spec((Hp, 4 * Hp)), resident_spec((1, 4 * Hp)),
        resident_spec((Hp, HEADp)), resident_spec((1, HEADp)),
    ]
    out_specs = (row_spec((bt, SLAB)), row_spec((bt, Hp)), row_spec((bt, Hp)))
    out_shape = (
        jax.ShapeDtypeStruct((Bp, SLAB), f32),   # packed [action, logprob, entropy, value]
        jax.ShapeDtypeStruct((Bp, Hp), f32),     # h_new
        jax.ShapeDtypeStruct((Bp, Hp), f32),     # c_new
    )

    flops = 2 * Bp * (OBSp * Hp + 2 * Hp * 4 * Hp + Hp * HEADp)
    transcendentals = Bp * (5 * Hp + 2 * HEADp)
    bytes_accessed = (sum(int(a.size) * a.dtype.itemsize for a in inputs)
                      + 4 * Bp * (SLAB + 2 * Hp))

    scalars, h_new, c_new = pl.pallas_call(
        _make_kernel(A, dot_dtype),
        out_shape=out_shape,
        grid=grid,
        in_specs=in_specs,
        out_specs=out_specs,
        compiler_params=pltpu.CompilerParams(dimension_semantics=("parallel",)),
        cost_estimate=pl.CostEstimate(flops=flops, transcendentals=transcendentals,
                                      bytes_accessed=bytes_accessed),
    )(*inputs)

    # Discrete path of sample_logits returns squeezed (B,) tensors; value stays (B,1).
    action = scalars[:B, 0].astype(jnp.int32)
    logprob = scalars[:B, 1]
    ent = scalars[:B, 2]
    value = scalars[:B, 3:4]
    return action, logprob, ent, value, (h_new[:B, :H], c_new[:B, :H])


def _jax_reference(x, state, params, gumbel):
    """Pure-JAX reference for correctness check."""
    h, c = state
    H = h.shape[-1]
    enc = jnp.maximum(x @ params["w_enc"] + params["b_enc"], 0.0)
    gates = enc @ params["w_ih"] + params["b_ih"] + h @ params["w_hh"] + params["b_hh"]
    i = jax.nn.sigmoid(gates[:, 0 * H:1 * H])
    f = jax.nn.sigmoid(gates[:, 1 * H:2 * H])
    g = jnp.tanh(gates[:, 2 * H:3 * H])
    o = jax.nn.sigmoid(gates[:, 3 * H:4 * H])
    c_new = f * c + i * g
    h_new = o * jnp.tanh(c_new)
    logits = h_new @ params["w_act"] + params["b_act"]
    value = h_new @ params["w_val"] + params["b_val"]
    norm = logits - jax.scipy.special.logsumexp(logits, axis=-1, keepdims=True)
    probs = jnp.exp(norm)
    action = jnp.argmax(logits + gumbel, axis=-1)
    logprob = jnp.take_along_axis(norm, action[:, None], axis=-1)[:, 0]
    ent = -jnp.sum(probs * norm, axis=-1)
    return action.astype(jnp.int32), logprob, ent, value, (h_new, c_new)


if __name__ == "__main__":
    B, OBS, H, A = 16, 16, 32, 8

    key = jax.random.PRNGKey(0)
    ks = jax.random.split(key, 12)
    params = {
        "w_enc": 0.1 * jax.random.normal(ks[0], (OBS, H), jnp.float32),
        "b_enc": 0.1 * jax.random.normal(ks[1], (H,), jnp.float32),
        "w_ih": 0.1 * jax.random.normal(ks[2], (H, 4 * H), jnp.float32),
        "b_ih": 0.1 * jax.random.normal(ks[3], (4 * H,), jnp.float32),
        "w_hh": 0.1 * jax.random.normal(ks[4], (H, 4 * H), jnp.float32),
        "b_hh": 0.1 * jax.random.normal(ks[5], (4 * H,), jnp.float32),
        "w_act": 0.1 * jax.random.normal(ks[6], (H, A), jnp.float32),
        "b_act": 0.1 * jax.random.normal(ks[7], (A,), jnp.float32),
        "w_val": 0.1 * jax.random.normal(ks[8], (H, 1), jnp.float32),
        "b_val": 0.1 * jax.random.normal(ks[9], (1,), jnp.float32),
    }
    x = jax.random.normal(ks[10], (B, OBS), jnp.float32)
    h0 = jnp.zeros((B, H), jnp.float32)
    c0 = jnp.zeros((B, H), jnp.float32)
    # Gumbel noise for categorical sampling (action=None case of sample_logits).
    gumbel = jax.random.gumbel(ks[11], (B, A), jnp.float32)

    # block_b=8 exercises a 2-step batch grid at this tiny demo size.
    outs = recurrent_policy_forward(x, (h0, c0), params, gumbel, block_b=8)
    action, logprob, entropy_v, value, (h1, c1) = jax.block_until_ready(outs)

    ra, rlp, re, rv, (rh, rc) = _jax_reference(x, (h0, c0), params, gumbel)
    assert jnp.array_equal(action, ra)
    assert jnp.allclose(logprob, rlp, atol=1e-3)
    assert jnp.allclose(entropy_v, re, atol=5e-3)   # approx reciprocal in probs
    assert jnp.allclose(value, rv, atol=1e-4)
    assert jnp.allclose(h1, rh, atol=1e-4)
    assert jnp.allclose(c1, rc, atol=1e-4)

    print("KERNEL_OK")
</pallas_src>

<mosaic_0001>
module attributes {stable_mosaic.version = 11 : i64} {
  func.func @kernel(%arg0: i32, %arg1: memref<8x16xf32, #tpu.memory_space<vmem>>, %arg2: memref<8x128xf32, #tpu.memory_space<vmem>>, %arg3: memref<8x128xf32, #tpu.memory_space<vmem>>, %arg4: memref<8x128xf32, #tpu.memory_space<vmem>>, %arg5: memref<16x128xf32, #tpu.memory_space<vmem>>, %arg6: memref<1x128xf32, #tpu.memory_space<vmem>>, %arg7: memref<128x512xf32, #tpu.memory_space<vmem>>, %arg8: memref<128x512xf32, #tpu.memory_space<vmem>>, %arg9: memref<1x512xf32, #tpu.memory_space<vmem>>, %arg10: memref<128x128xf32, #tpu.memory_space<vmem>>, %arg11: memref<1x128xf32, #tpu.memory_space<vmem>>, %arg12: memref<8x128xf32, #tpu.memory_space<vmem>>, %arg13: memref<8x128xf32, #tpu.memory_space<vmem>>, %arg14: memref<8x128xf32, #tpu.memory_space<vmem>>) attributes {dimension_semantics = [#tpu.dimension_semantics<parallel>], iteration_bounds = array<i64: 2>, scalar_prefetch = 0 : i64, scratch_operands = 0 : i64, tpu.core_type = #tpu.core_type<tc>, window_params = [{transform_indices = @transform_0, window_bounds = array<i64: 8, 16>}, {transform_indices = @transform_1, window_bounds = array<i64: 8, 128>}, {transform_indices = @transform_2, window_bounds = array<i64: 8, 128>}, {transform_indices = @transform_3, window_bounds = array<i64: 8, 128>}, {pipeline_mode = #tpu.pipeline_mode<synchronous>, transform_indices = @transform_4, window_bounds = array<i64: 16, 128>}, {pipeline_mode = #tpu.pipeline_mode<synchronous>, transform_indices = @transform_5, window_bounds = array<i64: 1, 128>}, {pipeline_mode = #tpu.pipeline_mode<synchronous>, transform_indices = @transform_6, window_bounds = array<i64: 128, 512>}, {pipeline_mode = #tpu.pipeline_mode<synchronous>, transform_indices = @transform_7, window_bounds = array<i64: 128, 512>}, {pipeline_mode = #tpu.pipeline_mode<synchronous>, transform_indices = @transform_8, window_bounds = array<i64: 1, 512>}, {pipeline_mode = #tpu.pipeline_mode<synchronous>, transform_indices = @transform_9, window_bounds = array<i64: 128, 128>}, {pipeline_mode = #tpu.pipeline_mode<synchronous>, transform_indices = @transform_10, window_bounds = array<i64: 1, 128>}, {transform_indices = @transform_11, window_bounds = array<i64: 8, 128>}, {transform_indices = @transform_12, window_bounds = array<i64: 8, 128>}, {transform_indices = @transform_13, window_bounds = array<i64: 8, 128>}]} {
    %c0 = arith.constant 0 : index
    %c0_0 = arith.constant 0 : index
    %0 = vector.load %arg1[%c0, %c0_0] : memref<8x16xf32, #tpu.memory_space<vmem>>, vector<8x16xf32>
    %c0_1 = arith.constant 0 : index
    %c0_2 = arith.constant 0 : index
    %1 = vector.load %arg2[%c0_1, %c0_2] : memref<8x128xf32, #tpu.memory_space<vmem>>, vector<8x128xf32>
    %c0_3 = arith.constant 0 : index
    %c0_4 = arith.constant 0 : index
    %2 = vector.load %arg3[%c0_3, %c0_4] : memref<8x128xf32, #tpu.memory_space<vmem>>, vector<8x128xf32>
    %c0_5 = arith.constant 0 : index
    %c0_6 = arith.constant 0 : index
    %3 = vector.load %arg5[%c0_5, %c0_6] : memref<16x128xf32, #tpu.memory_space<vmem>>, vector<16x128xf32>
    %cst = arith.constant dense<0.000000e+00> : vector<8x128xf32>
    %4 = tpu.matmul %0, %3, %cst {dimension_numbers = #tpu.dot_dimension_numbers<[1], [0], [0], [1], [0, 0, 1, 1], [], []>} : vector<8x16xf32>, vector<16x128xf32>, vector<8x128xf32> -> vector<8x128xf32>
    %c0_7 = arith.constant 0 : index
    %c0_8 = arith.constant 0 : index
    %5 = vector.load %arg6[%c0_7, %c0_8] : memref<1x128xf32, #tpu.memory_space<vmem>>, vector<1x128xf32>
    %6 = vector.broadcast %5 : vector<1x128xf32> to vector<8x128xf32>
    %7 = arith.addf %4, %6 : vector<8x128xf32>
    %cst_9 = arith.constant 0.000000e+00 : f32
    %8 = vector.broadcast %cst_9 : f32 to vector<8x128xf32>
    %9 = arith.maximumf %7, %8 : vector<8x128xf32>
    %c0_10 = arith.constant 0 : index
    %c0_11 = arith.constant 0 : index
    %10 = vector.load %arg7[%c0_10, %c0_11] : memref<128x512xf32, #tpu.memory_space<vmem>>, vector<128x512xf32>
    %cst_12 = arith.constant dense<0.000000e+00> : vector<8x512xf32>
    %11 = tpu.matmul %9, %10, %cst_12 {dimension_numbers = #tpu.dot_dimension_numbers<[1], [0], [0], [1], [0, 0, 1, 1], [], []>} : vector<8x128xf32>, vector<128x512xf32>, vector<8x512xf32> -> vector<8x512xf32>
    %c0_13 = arith.constant 0 : index
    %c0_14 = arith.constant 0 : index
    %12 = vector.load %arg8[%c0_13, %c0_14] : memref<128x512xf32, #tpu.memory_space<vmem>>, vector<128x512xf32>
    %cst_15 = arith.constant dense<0.000000e+00> : vector<8x512xf32>
    %13 = tpu.matmul %1, %12, %cst_15 {dimension_numbers = #tpu.dot_dimension_numbers<[1], [0], [0], [1], [0, 0, 1, 1], [], []>} : vector<8x128xf32>, vector<128x512xf32>, vector<8x512xf32> -> vector<8x512xf32>
    %14 = arith.addf %11, %13 : vector<8x512xf32>
    %c0_16 = arith.constant 0 : index
    %c0_17 = arith.constant 0 : index
    %15 = vector.load %arg9[%c0_16, %c0_17] : memref<1x512xf32, #tpu.memory_space<vmem>>, vector<1x512xf32>
    %16 = vector.broadcast %15 : vector<1x512xf32> to vector<8x512xf32>
    %17 = arith.addf %14, %16 : vector<8x512xf32>
    %18 = vector.extract_strided_slice %17 {offsets = [0, 0], sizes = [8, 128], strides = [1, 1]} : vector<8x512xf32> to vector<8x128xf32>
    %19 = arith.negf %18 : vector<8x128xf32>
    %20 = math.exp %19 : vector<8x128xf32>
    %cst_18 = arith.constant 1.000000e+00 : f32
    %21 = vector.broadcast %cst_18 : f32 to vector<8x128xf32>
    %22 = arith.addf %21, %20 : vector<8x128xf32>
    %23 = arith.divf %21, %22 : vector<8x128xf32>
    %24 = vector.extract_strided_slice %17 {offsets = [0, 128], sizes = [8, 128], strides = [1, 1]} : vector<8x512xf32> to vector<8x128xf32>
    %25 = arith.negf %24 : vector<8x128xf32>
    %26 = math.exp %25 : vector<8x128xf32>
    %cst_19 = arith.constant 1.000000e+00 : f32
    %27 = vector.broadcast %cst_19 : f32 to vector<8x128xf32>
    %28 = arith.addf %27, %26 : vector<8x128xf32>
    %29 = arith.divf %27, %28 : vector<8x128xf32>
    %30 = vector.extract_strided_slice %17 {offsets = [0, 256], sizes = [8, 128], strides = [1, 1]} : vector<8x512xf32> to vector<8x128xf32>
    %31 = math.tanh %30 : vector<8x128xf32>
    %32 = vector.extract_strided_slice %17 {offsets = [0, 384], sizes = [8, 128], strides = [1, 1]} : vector<8x512xf32> to vector<8x128xf32>
    %33 = arith.negf %32 : vector<8x128xf32>
    %34 = math.exp %33 : vector<8x128xf32>
    %cst_20 = arith.constant 1.000000e+00 : f32
    %35 = vector.broadcast %cst_20 : f32 to vector<8x128xf32>
    %36 = arith.addf %35, %34 : vector<8x128xf32>
    %37 = arith.divf %35, %36 : vector<8x128xf32>
    %38 = arith.mulf %29, %2 : vector<8x128xf32>
    %39 = arith.mulf %23, %31 : vector<8x128xf32>
    %40 = arith.addf %38, %39 : vector<8x128xf32>
    %41 = math.tanh %40 : vector<8x128xf32>
    %42 = arith.mulf %37, %41 : vector<8x128xf32>
    %c0_21 = arith.constant 0 : index
    %c0_22 = arith.constant 0 : index
    %43 = vector.load %arg10[%c0_21, %c0_22] : memref<128x128xf32, #tpu.memory_space<vmem>>, vector<128x128xf32>
    %cst_23 = arith.constant dense<0.000000e+00> : vector<8x128xf32>
    %44 = tpu.matmul %42, %43, %cst_23 {dimension_numbers = #tpu.dot_dimension_numbers<[1], [0], [0], [1], [0, 0, 1, 1], [], []>} : vector<8x128xf32>, vector<128x128xf32>, vector<8x128xf32> -> vector<8x128xf32>
    %c0_24 = arith.constant 0 : index
    %c0_25 = arith.constant 0 : index
    %45 = vector.load %arg11[%c0_24, %c0_25] : memref<1x128xf32, #tpu.memory_space<vmem>>, vector<1x128xf32>
    %46 = vector.broadcast %45 : vector<1x128xf32> to vector<8x128xf32>
    %47 = arith.addf %44, %46 : vector<8x128xf32>
    %48 = tpu.iota {dimensions = array<i32: 1>} : vector<8x128xi32>
    %c8_i32 = arith.constant 8 : i32
    %49 = vector.broadcast %c8_i32 : i32 to vector<8x128xi32>
    %50 = arith.cmpi slt, %48, %49 : vector<8x128xi32>
    %cst_26 = arith.constant -1.000000e+30 : f32
    %51 = vector.broadcast %cst_26 : f32 to vector<8x128xf32>
    %52 = arith.select %50, %47, %51 : vector<8x128xi1>, vector<8x128xf32>
    %c8_i32_27 = arith.constant 8 : i32
    %53 = vector.broadcast %c8_i32_27 : i32 to vector<8x128xi32>
    %54 = arith.cmpi eq, %48, %53 : vector<8x128xi32>
    %cst_28 = arith.constant 0.000000e+00 : f32
    %55 = vector.broadcast %cst_28 : f32 to vector<8x128xf32>
    %56 = arith.select %54, %47, %55 : vector<8x128xi1>, vector<8x128xf32>
    %cst_29 = arith.constant dense<0.000000e+00> : vector<8xf32>
    %57 = vector.multi_reduction <add>, %56, %cst_29 [1] : vector<8x128xf32> to vector<8xf32>
    %58 = vector.shape_cast %57 : vector<8xf32> to vector<8x1xf32>
    %cst_30 = arith.constant dense<0xFF800000> : vector<8xf32>
    %59 = vector.multi_reduction <maximumf>, %52, %cst_30 [1] : vector<8x128xf32> to vector<8xf32>
    %60 = vector.shape_cast %59 : vector<8xf32> to vector<8x1xf32>
    %61 = vector.broadcast %60 : vector<8x1xf32> to vector<8x128xf32>
    %62 = arith.subf %52, %61 : vector<8x128xf32>
    %63 = math.exp %62 : vector<8x128xf32>
    %cst_31 = arith.constant dense<0.000000e+00> : vector<8xf32>
    %64 = vector.multi_reduction <add>, %63, %cst_31 [1] : vector<8x128xf32> to vector<8xf32>
    %65 = vector.shape_cast %64 : vector<8xf32> to vector<8x1xf32>
    %66 = tpu.reciprocal %65 {approx = true} : vector<8x1xf32> -> vector<8x1xf32>
    %67 = vector.broadcast %66 : vector<8x1xf32> to vector<8x128xf32>
    %68 = arith.mulf %63, %67 : vector<8x128xf32>
    %69 = math.log %65 : vector<8x1xf32>
    %70 = vector.broadcast %69 : vector<8x1xf32> to vector<8x128xf32>
    %71 = arith.subf %62, %70 : vector<8x128xf32>
    %cst_32 = arith.constant -3.40282347E+38 : f32
    %72 = vector.broadcast %cst_32 : f32 to vector<8x128xf32>
    %73 = arith.maximumf %71, %72 : vector<8x128xf32>
    %c0_33 = arith.constant 0 : index
    %c0_34 = arith.constant 0 : index
    %74 = vector.load %arg4[%c0_33, %c0_34] : memref<8x128xf32, #tpu.memory_space<vmem>>, vector<8x128xf32>
    %75 = arith.addf %52, %74 : vector<8x128xf32>
    %cst_35 = arith.constant dense<0xFF800000> : vector<8xf32>
    %76 = vector.multi_reduction <maximumf>, %75, %cst_35 [1] : vector<8x128xf32> to vector<8xf32>
    %77 = vector.shape_cast %76 : vector<8xf32> to vector<8x1xf32>
    %78 = vector.broadcast %77 : vector<8x1xf32> to vector<8x128xf32>
    %79 = arith.cmpf oge, %75, %78 : vector<8x128xf32>
    %c8_i32_36 = arith.constant 8 : i32
    %80 = vector.broadcast %c8_i32_36 : i32 to vector<8x128xi32>
    %81 = arith.select %79, %48, %80 : vector<8x128xi1>, vector<8x128xi32>
    %cst_37 = arith.constant dense<2147483647> : vector<8xi32>
    %82 = vector.multi_reduction <minsi>, %81, %cst_37 [1] : vector<8x128xi32> to vector<8xi32>
    %83 = vector.shape_cast %82 : vector<8xi32> to vector<8x1xi32>
    %84 = vector.broadcast %83 : vector<8x1xi32> to vector<8x128xi32>
    %85 = arith.cmpi eq, %48, %84 : vector<8x128xi32>
    %cst_38 = arith.constant -1.000000e+30 : f32
    %86 = vector.broadcast %cst_38 : f32 to vector<8x128xf32>
    %87 = arith.select %85, %73, %86 : vector<8x128xi1>, vector<8x128xf32>
    %cst_39 = arith.constant dense<0xFF800000> : vector<8xf32>
    %88 = vector.multi_reduction <maximumf>, %87, %cst_39 [1] : vector<8x128xf32> to vector<8xf32>
    %89 = vector.shape_cast %88 : vector<8xf32> to vector<8x1xf32>
    %90 = arith.mulf %68, %73 : vector<8x128xf32>
    %cst_40 = arith.constant dense<0.000000e+00> : vector<8xf32>
    %91 = vector.multi_reduction <add>, %90, %cst_40 [1] : vector<8x128xf32> to vector<8xf32>
    %92 = vector.shape_cast %91 : vector<8xf32> to vector<8x1xf32>
    %cst_41 = arith.constant 0.000000e+00 : f32
    %93 = vector.broadcast %cst_41 : f32 to vector<8x1xf32>
    %94 = arith.subf %93, %92 : vector<8x1xf32>
    %95 = tpu.iota {dimensions = array<i32: 1>} : vector<8x128xi32>
    %c0_i32 = arith.constant 0 : i32
    %96 = vector.broadcast %c0_i32 : i32 to vector<8x128xi32>
    %97 = arith.cmpi eq, %95, %96 : vector<8x128xi32>
    %98 = arith.sitofp %83 : vector<8x1xi32> to vector<8x1xf32>
    %c1_i32 = arith.constant 1 : i32
    %99 = vector.broadcast %c1_i32 : i32 to vector<8x128xi32>
    %100 = arith.cmpi eq, %95, %99 : vector<8x128xi32>
    %c2_i32 = arith.constant 2 : i32
    %101 = vector.broadcast %c2_i32 : i32 to vector<8x128xi32>
    %102 = arith.cmpi eq, %95, %101 : vector<8x128xi32>
    %103 = vector.shape_cast %94 : vector<8x1xf32> to vector<8x1xf32>
    %104 = vector.broadcast %103 : vector<8x1xf32> to vector<8x128xf32>
    %105 = vector.shape_cast %58 : vector<8x1xf32> to vector<8x1xf32>
    %106 = vector.broadcast %105 : vector<8x1xf32> to vector<8x128xf32>
    %107 = arith.select %102, %104, %106 : vector<8x128xi1>, vector<8x128xf32>
    %108 = vector.shape_cast %89 : vector<8x1xf32> to vector<8x1xf32>
    %109 = vector.broadcast %108 : vector<8x1xf32> to vector<8x128xf32>
    %110 = arith.select %100, %109, %107 : vector<8x128xi1>, vector<8x128xf32>
    %111 = vector.shape_cast %98 : vector<8x1xf32> to vector<8x1xf32>
    %112 = vector.broadcast %111 : vector<8x1xf32> to vector<8x128xf32>
    %113 = arith.select %97, %112, %110 : vector<8x128xi1>, vector<8x128xf32>
    %c0_42 = arith.constant 0 : index
    %c0_43 = arith.constant 0 : index
    %114 = vector.load %arg12[%c0_42, %c0_43] : memref<8x128xf32, #tpu.memory_space<vmem>>, vector<8x128xf32>
    tpu.vector_store %arg12[%c0_42, %c0_43], %113 {strides = array<i32>} : memref<8x128xf32, #tpu.memory_space<vmem>>, vector<8x128xf32>,
    %c0_44 = arith.constant 0 : index
    %c0_45 = arith.constant 0 : index
    %115 = vector.load %arg13[%c0_44, %c0_45] : memref<8x128xf32, #tpu.memory_space<vmem>>, vector<8x128xf32>
    tpu.vector_store %arg13[%c0_44, %c0_45], %42 {strides = array<i32>} : memref<8x128xf32, #tpu.memory_space<vmem>>, vector<8x128xf32>,
    %c0_46 = arith.constant 0 : index
    %c0_47 = arith.constant 0 : index
    %116 = vector.load %arg14[%c0_46, %c0_47] : memref<8x128xf32, #tpu.memory_space<vmem>>, vector<8x128xf32>
    tpu.vector_store %arg14[%c0_46, %c0_47], %40 {strides = array<i32>} : memref<8x128xf32, #tpu.memory_space<vmem>>, vector<8x128xf32>,
    return
  }
  func.func @transform_0(%arg0: i32) -> (i32, i32) {
    %c0_i32 = arith.constant 0 : i32
    %c0_i32_0 = arith.constant 0 : i32
    return %arg0, %c0_i32 : i32, i32
  }
  func.func @transform_1(%arg0: i32) -> (i32, i32) {
    %c0_i32 = arith.constant 0 : i32
    %c0_i32_0 = arith.constant 0 : i32
    return %arg0, %c0_i32 : i32, i32
  }
  func.func @transform_2(%arg0: i32) -> (i32, i32) {
    %c0_i32 = arith.constant 0 : i32
    %c0_i32_0 = arith.constant 0 : i32
    return %arg0, %c0_i32 : i32, i32
  }
  func.func @transform_3(%arg0: i32) -> (i32, i32) {
    %c0_i32 = arith.constant 0 : i32
    %c0_i32_0 = arith.constant 0 : i32
    return %arg0, %c0_i32 : i32, i32
  }
  func.func @transform_4(%arg0: i32) -> (i32, i32) {
    %c0_i32 = arith.constant 0 : i32
    %c0_i32_0 = arith.constant 0 : i32
    %c0_i32_1 = arith.constant 0 : i32
    return %c0_i32, %c0_i32_0 : i32, i32
  }
  func.func @transform_5(%arg0: i32) -> (i32, i32) {
    %c0_i32 = arith.constant 0 : i32
    %c0_i32_0 = arith.constant 0 : i32
    %c0_i32_1 = arith.constant 0 : i32
    return %c0_i32, %c0_i32_0 : i32, i32
  }
  func.func @transform_6(%arg0: i32) -> (i32, i32) {
    %c0_i32 = arith.constant 0 : i32
    %c0_i32_0 = arith.constant 0 : i32
    %c0_i32_1 = arith.constant 0 : i32
    return %c0_i32, %c0_i32_0 : i32, i32
  }
  func.func @transform_7(%arg0: i32) -> (i32, i32) {
    %c0_i32 = arith.constant 0 : i32
    %c0_i32_0 = arith.constant 0 : i32
    %c0_i32_1 = arith.constant 0 : i32
    return %c0_i32, %c0_i32_0 : i32, i32
  }
  func.func @transform_8(%arg0: i32) -> (i32, i32) {
    %c0_i32 = arith.constant 0 : i32
    %c0_i32_0 = arith.constant 0 : i32
    %c0_i32_1 = arith.constant 0 : i32
    return %c0_i32, %c0_i32_0 : i32, i32
  }
  func.func @transform_9(%arg0: i32) -> (i32, i32) {
    %c0_i32 = arith.constant 0 : i32
    %c0_i32_0 = arith.constant 0 : i32
    %c0_i32_1 = arith.constant 0 : i32
    return %c0_i32, %c0_i32_0 : i32, i32
  }
  func.func @transform_10(%arg0: i32) -> (i32, i32) {
    %c0_i32 = arith.constant 0 : i32
    %c0_i32_0 = arith.constant 0 : i32
    %c0_i32_1 = arith.constant 0 : i32
    return %c0_i32, %c0_i32_0 : i32, i32
  }
  func.func @transform_11(%arg0: i32) -> (i32, i32) {
    %c0_i32 = arith.constant 0 : i32
    %c0_i32_0 = arith.constant 0 : i32
    return %arg0, %c0_i32 : i32, i32
  }
  func.func @transform_12(%arg0: i32) -> (i32, i32) {
    %c0_i32 = arith.constant 0 : i32
    %c0_i32_0 = arith.constant 0 : i32
    return %arg0, %c0_i32 : i32, i32
  }
  func.func @transform_13(%arg0: i32) -> (i32, i32) {
    %c0_i32 = arith.constant 0 : i32
    %c0_i32_0 = arith.constant 0 : i32
    return %arg0, %c0_i32 : i32, i32
  }
}

</mosaic_0001>

<llo_original>
// kernel: tpu_custom_call.1
$region0: #{tpu_custom_call.1}
  #allocation0 [shape = 'u32[]', space=smem, size = 0x4, offset = 0x4, fixed_abs, tag = 'smem constant byte address 0x4 - core index']
  #allocation1 [shape = 'u32[144,128]{1,0:T(1,128)}', space=vmem, size = 0x12000, scoped, tag = 'internal scratch']
  %s0 = inlined_call_operand.hbm [shape: f32[16,16], index: 0, kind: input, shape index: {}]
  %s1 = inlined_call_operand.hbm [shape: f32[16,128], index: 1, kind: input, shape index: {}]
  %s2 = inlined_call_operand.hbm [shape: f32[16,128], index: 2, kind: input, shape index: {}]
  %s3 = inlined_call_operand.hbm [shape: f32[16,128], index: 3, kind: input, shape index: {}]
  %s4 = inlined_call_operand.hbm [shape: f32[16,128], index: 4, kind: input, shape index: {}]
  %s5 = inlined_call_operand.vmem [shape: f32[1,128], index: 5, kind: input, shape index: {}]
  %s6 = inlined_call_operand.hbm [shape: f32[128,512], index: 6, kind: input, shape index: {}]
  %s7 = inlined_call_operand.hbm [shape: f32[128,512], index: 7, kind: input, shape index: {}]
  %s8 = inlined_call_operand.vmem [shape: f32[1,512], index: 8, kind: input, shape index: {}]
  %s9 = inlined_call_operand.hbm [shape: f32[128,128], index: 9, kind: input, shape index: {}]
  %s10 = inlined_call_operand.vmem [shape: f32[1,128], index: 10, kind: input, shape index: {}]
  %s11 = inlined_call_operand.hbm [shape: f32[16,128], index: 11, kind: output, shape index: {0}]
  %s12 = inlined_call_operand.hbm [shape: f32[16,128], index: 12, kind: output, shape index: {1}]
  %s13 = inlined_call_operand.hbm [shape: f32[16,128], index: 13, kind: output, shape index: {2}]
  %14 = xla_tuple %s11, %s12, %s13
  %s15 = sld [smem:[#allocation0]]
  $region125: #{tpu_custom_call.1} parent=0
    _
  %s17 = ssub.s32 1, %s15
  %s18 = scalar_select 0, %s17, %s15
  $region1: #{tpu_custom_call.1} parent=0
    #allocation2 [shape = 'u8[8192]{0}', space=vmem, size = 0x2000, scoped, tag = 'input window, operand 0']
    #allocation3 [shape = 's32[2]{0}', space=sflag, size = 0x8, scoped, tag = 'scoped memory for tpu_custom_call.1']
    #allocation4 [shape = 's32[2]{0}', space=sflag, size = 0x8, scoped, tag = 'scoped memory for tpu_custom_call.1']
    #allocation5 [shape = 'u8[8192]{0}', space=vmem, size = 0x2000, scoped, tag = 'input window, operand 1']
    #allocation6 [shape = 's32[2]{0}', space=sflag, size = 0x8, scoped, tag = 'scoped memory for tpu_custom_call.1']
    #allocation7 [shape = 'u8[8192]{0}', space=vmem, size = 0x2000, scoped, tag = 'input window, operand 2']
    #allocation8 [shape = 'u8[8192]{0}', space=vmem, size = 0x2000, scoped, tag = 'input window, operand 3']
    #allocation9 [shape = 's32[2]{0}', space=sflag, size = 0x8, scoped, tag = 'scoped memory for tpu_custom_call.1']
    #allocation10 [shape = 'u8[8192]{0}', space=vmem, size = 0x2000, scoped, tag = 'input window, operand 4, single buffered']
    #allocation11 [shape = 'u8[262144]{0}', space=vmem, size = 0x40000, scoped, tag = 'input window, operand 6, single buffered']
    #allocation12 [shape = 's32[1]{0}', space=sflag, size = 0x4, scoped, tag = 'scoped memory for tpu_custom_call.1']
    #allocation13 [shape = 'u8[262144]{0}', space=vmem, size = 0x40000, scoped, tag = 'input window, operand 7, single buffered']
    #allocation14 [shape = 'u8[65536]{0}', space=vmem, size = 0x10000, scoped, tag = 'input window, operand 9, single buffered']
    #allocation15 [shape = 's32[1]{0}', space=sflag, size = 0x4, scoped, tag = 'scoped memory for tpu_custom_call.1']
    #allocation16 [shape = 'u8[8192]{0}', space=vmem, size = 0x2000, scoped, tag = 'output window, operand 0']
    #allocation17 [shape = 'u8[8192]{0}', space=vmem, size = 0x2000, scoped, tag = 'output window, operand 1']
    #allocation18 [shape = 's32[2]{0}', space=sflag, size = 0x8, scoped, tag = 'scoped memory for tpu_custom_call.1']
    #allocation19 [shape = 'u8[8192]{0}', space=vmem, size = 0x2000, scoped, tag = 'output window, operand 2']
    %19 = vsyncpa [#allocation3], 0
    %s20 = scalar_lea.sflag [#allocation3], 1
    %21 = vsyncpa %s20, 0
    %22 = vsyncpa [#allocation6], 0
    %s23 = scalar_lea.sflag [#allocation6], 1
    %24 = vsyncpa %s23, 0
    %25 = vsyncpa [#allocation9], 0
    %s26 = scalar_lea.sflag [#allocation9], 1
    %27 = vsyncpa %s26, 0
    %28 = vsyncpa [#allocation12], 0
    %29 = vsyncpa [#allocation15], 0
    %30 = vsyncpa [#allocation4], 0
    %s31 = scalar_lea.sflag [#allocation4], 1
    %32 = vsyncpa %s31, 0
    %33 = vsyncpa [#allocation18], 0
    %s34 = scalar_lea.sflag [#allocation18], 1
    %35 = vsyncpa %s34, 0
    loop: start=0, step=1, limit=4
    $region2: #{tpu_custom_call.1} parent=1 // loop_pre_header
      _
    $region3: #{tpu_custom_call.1} parent=1 // loop_header
      %s37 = sphi 0, %s41
      %p38 = scmp.ge.s32.totalorder %s37, 4
      %s47 = sphi 0, %s49
      %s50 = sphi 0, %s47
      %s51 = sphi 0, %s50
      %s67 = sphi 0, %s51
      %s73 = sphi 0, %s75
      %s76 = sphi 0, %s73
      %s77 = sphi 0, %s76
      %s93 = sphi 0, %s77
      %s99 = sphi 0, %s101
      %s102 = sphi 0, %s99
      %s103 = sphi 0, %s102
      %s119 = sphi 0, %s103
      %s125 = sphi 0, %s127
      %s128 = sphi 0, %s125
      %s129 = sphi 0, %s128
      %s145 = sphi 0, %s129
      %s149 = sphi 0, %s149
      %s151 = sphi 0, %s149
      %s152 = sphi 0, %s151
      %s166 = sphi 0, %s152
      %s170 = sphi 0, %s170
      %s172 = sphi 0, %s170
      %s173 = sphi 0, %s172
      %s187 = sphi 0, %s173
      %s191 = sphi 0, %s191
      %s193 = sphi 0, %s191
      %s194 = sphi 0, %s193
      %s208 = sphi 0, %s194
      %s212 = sphi 0, %s212
      %s214 = sphi 0, %s212
      %s215 = sphi 0, %s214
      %s229 = sphi 0, %s215
      %s233 = sphi 0, %s233
      %s235 = sphi 0, %s233
      %s236 = sphi 0, %s235
      %s250 = sphi 0, %s236
      %s254 = sphi 0, %s254
      %s256 = sphi 0, %s254
      %s257 = sphi 0, %s256
      %s271 = sphi 0, %s257
      %s275 = sphi 0, %s275
      %s277 = sphi 0, %s275
      %s278 = sphi 0, %s277
      %s292 = sphi 0, %s278
      %s298 = sphi 0, %s300
      %s301 = sphi 0, %s298
      %s302 = sphi 0, %s301
      %s318 = sphi 0, %s302
      %s324 = sphi 0, %s326
      %s327 = sphi 0, %s324
      %s328 = sphi 0, %s327
      %s344 = sphi 0, %s328
      %s350 = sphi 0, %s352
      %s353 = sphi 0, %s350
      %s354 = sphi 0, %s353
      %s370 = sphi 0, %s354
    $region4: #{tpu_custom_call.1} parent=1 // loop_header_branch
      %40 = sbr.rel (%p38) target = $region8
    $region5: #{tpu_custom_call.1} parent=1 // loop_body
      %s42 = ssub.s32 %s37, 1
      %s43 = ssub.s32 %s37, 2
      %s44 = sadd.s32 %s37, 1
      %s45 = ssub.s32 %s37, %s44
      %p46 = scmp.eq.s32.totalorder %s45, 0
      %s48 = sadd.s32 %s47, 1
      %s49 = scalar_select %p46, %s47, %s48
      %p52 = pneg %p46
      %p53 = scmp.eq.s32.totalorder %s37, 1
      %p54 = por %p52, %p53
      %p55 = scmp.ne.s32.totalorder %s47, %s50
      %p56 = scmp.eq.s32.totalorder %s37, 0
      %p57 = por %p55, %p56
      %p58 = scmp.ne.s32.totalorder %s47, %s50
      %p59 = scmp.eq.s32.totalorder %s42, 1
      %p60 = por %p58, %p59
      %p61 = scmp.ne.s32.totalorder %s50, %s51
      %p62 = scmp.eq.s32.totalorder %s42, 0
      %p63 = por %p61, %p62
      %p64 = scmp.ne.s32.totalorder %s50, %s51
      %p65 = scmp.eq.s32.totalorder %s43, 1
      %p66 = por %p64, %p65
      %p68 = scmp.ne.s32.totalorder %s51, %s67
      %p69 = scmp.eq.s32.totalorder %s43, 0
      %p70 = por %p68, %p69
      %s71 = ssub.s32 %s37, %s44
      %p72 = scmp.eq.s32.totalorder %s71, 0
      %s74 = sadd.s32 %s73, 1
      %s75 = scalar_select %p72, %s73, %s74
      %p78 = pneg %p72
      %p79 = scmp.eq.s32.totalorder %s37, 1
      %p80 = por %p78, %p79
      %p81 = scmp.ne.s32.totalorder %s73, %s76
      %p82 = scmp.eq.s32.totalorder %s37, 0
      %p83 = por %p81, %p82
      %p84 = scmp.ne.s32.totalorder %s73, %s76
      %p85 = scmp.eq.s32.totalorder %s42, 1
      %p86 = por %p84, %p85
      %p87 = scmp.ne.s32.totalorder %s76, %s77
      %p88 = scmp.eq.s32.totalorder %s42, 0
      %p89 = por %p87, %p88
      %p90 = scmp.ne.s32.totalorder %s76, %s77
      %p91 = scmp.eq.s32.totalorder %s43, 1
      %p92 = por %p90, %p91
      %p94 = scmp.ne.s32.totalorder %s77, %s93
      %p95 = scmp.eq.s32.totalorder %s43, 0
      %p96 = por %p94, %p95
      %s97 = ssub.s32 %s37, %s44
      %p98 = scmp.eq.s32.totalorder %s97, 0
      %s100 = sadd.s32 %s99, 1
      %s101 = scalar_select %p98, %s99, %s100
      %p104 = pneg %p98
      %p105 = scmp.eq.s32.totalorder %s37, 1
      %p106 = por %p104, %p105
      %p107 = scmp.ne.s32.totalorder %s99, %s102
      %p108 = scmp.eq.s32.totalorder %s37, 0
      %p109 = por %p107, %p108
      %p110 = scmp.ne.s32.totalorder %s99, %s102
      %p111 = scmp.eq.s32.totalorder %s42, 1
      %p112 = por %p110, %p111
      %p113 = scmp.ne.s32.totalorder %s102, %s103
      %p114 = scmp.eq.s32.totalorder %s42, 0
      %p115 = por %p113, %p114
      %p116 = scmp.ne.s32.totalorder %s102, %s103
      %p117 = scmp.eq.s32.totalorder %s43, 1
      %p118 = por %p116, %p117
      %p120 = scmp.ne.s32.totalorder %s103, %s119
      %p121 = scmp.eq.s32.totalorder %s43, 0
      %p122 = por %p120, %p121
      %s123 = ssub.s32 %s37, %s44
      %p124 = scmp.eq.s32.totalorder %s123, 0
      %s126 = sadd.s32 %s125, 1
      %s127 = scalar_select %p124, %s125, %s126
      %p130 = pneg %p124
      %p131 = scmp.eq.s32.totalorder %s37, 1
      %p132 = por %p130, %p131
      %p133 = scmp.ne.s32.totalorder %s125, %s128
      %p134 = scmp.eq.s32.totalorder %s37, 0
      %p135 = por %p133, %p134
      %p136 = scmp.ne.s32.totalorder %s125, %s128
      %p137 = scmp.eq.s32.totalorder %s42, 1
      %p138 = por %p136, %p137
      %p139 = scmp.ne.s32.totalorder %s128, %s129
      %p140 = scmp.eq.s32.totalorder %s42, 0
      %p141 = por %p139, %p140
      %p142 = scmp.ne.s32.totalorder %s128, %s129
      %p143 = scmp.eq.s32.totalorder %s43, 1
      %p144 = por %p142, %p143
      %p146 = scmp.ne.s32.totalorder %s129, %s145
      %p147 = scmp.eq.s32.totalorder %s43, 0
      %p148 = por %p146, %p147
      %s150 = sadd.s32 %s149, 1
      %p153 = scmp.eq.s32.totalorder %s37, 1
      %p154 = scmp.ne.s32.totalorder %s149, %s151
      %p155 = scmp.eq.s32.totalorder %s37, 0
      %p156 = por %p154, %p155
      %p157 = scmp.ne.s32.totalorder %s149, %s151
      %p158 = scmp.eq.s32.totalorder %s42, 1
      %p159 = por %p157, %p158
      %p160 = scmp.ne.s32.totalorder %s151, %s152
      %p161 = scmp.eq.s32.totalorder %s42, 0
      %p162 = por %p160, %p161
      %p163 = scmp.ne.s32.totalorder %s151, %s152
      %p164 = scmp.eq.s32.totalorder %s43, 1
      %p165 = por %p163, %p164
      %p167 = scmp.ne.s32.totalorder %s152, %s166
      %p168 = scmp.eq.s32.totalorder %s43, 0
      %p169 = por %p167, %p168
      %s171 = sadd.s32 %s170, 1
      %p174 = scmp.eq.s32.totalorder %s37, 1
      %p175 = scmp.ne.s32.totalorder %s170, %s172
      %p176 = scmp.eq.s32.totalorder %s37, 0
      %p177 = por %p175, %p176
      %p178 = scmp.ne.s32.totalorder %s170, %s172
      %p179 = scmp.eq.s32.totalorder %s42, 1
      %p180 = por %p178, %p179
      %p181 = scmp.ne.s32.totalorder %s172, %s173
      %p182 = scmp.eq.s32.totalorder %s42, 0
      %p183 = por %p181, %p182
      %p184 = scmp.ne.s32.totalorder %s172, %s173
      %p185 = scmp.eq.s32.totalorder %s43, 1
      %p186 = por %p184, %p185
      %p188 = scmp.ne.s32.totalorder %s173, %s187
      %p189 = scmp.eq.s32.totalorder %s43, 0
      %p190 = por %p188, %p189
      %s192 = sadd.s32 %s191, 1
      %p195 = scmp.eq.s32.totalorder %s37, 1
      %p196 = scmp.ne.s32.totalorder %s191, %s193
      %p197 = scmp.eq.s32.totalorder %s37, 0
      %p198 = por %p196, %p197
      %p199 = scmp.ne.s32.totalorder %s191, %s193
      %p200 = scmp.eq.s32.totalorder %s42, 1
      %p201 = por %p199, %p200
      %p202 = scmp.ne.s32.totalorder %s193, %s194
      %p203 = scmp.eq.s32.totalorder %s42, 0
      %p204 = por %p202, %p203
      %p205 = scmp.ne.s32.totalorder %s193, %s194
      %p206 = scmp.eq.s32.totalorder %s43, 1
      %p207 = por %p205, %p206
      %p209 = scmp.ne.s32.totalorder %s194, %s208
      %p210 = scmp.eq.s32.totalorder %s43, 0
      %p211 = por %p209, %p210
      %s213 = sadd.s32 %s212, 1
      %p216 = scmp.eq.s32.totalorder %s37, 1
      %p217 = scmp.ne.s32.totalorder %s212, %s214
      %p218 = scmp.eq.s32.totalorder %s37, 0
      %p219 = por %p217, %p218
      %p220 = scmp.ne.s32.totalorder %s212, %s214
      %p221 = scmp.eq.s32.totalorder %s42, 1
      %p222 = por %p220, %p221
      %p223 = scmp.ne.s32.totalorder %s214, %s215
      %p224 = scmp.eq.s32.totalorder %s42, 0
      %p225 = por %p223, %p224
      %p226 = scmp.ne.s32.totalorder %s214, %s215
      %p227 = scmp.eq.s32.totalorder %s43, 1
      %p228 = por %p226, %p227
      %p230 = scmp.ne.s32.totalorder %s215, %s229
      %p231 = scmp.eq.s32.totalorder %s43, 0
      %p232 = por %p230, %p231
      %s234 = sadd.s32 %s233, 1
      %p237 = scmp.eq.s32.totalorder %s37, 1
      %p238 = scmp.ne.s32.totalorder %s233, %s235
      %p239 = scmp.eq.s32.totalorder %s37, 0
      %p240 = por %p238, %p239
      %p241 = scmp.ne.s32.totalorder %s233, %s235
      %p242 = scmp.eq.s32.totalorder %s42, 1
      %p243 = por %p241, %p242
      %p244 = scmp.ne.s32.totalorder %s235, %s236
      %p245 = scmp.eq.s32.totalorder %s42, 0
      %p246 = por %p244, %p245
      %p247 = scmp.ne.s32.totalorder %s235, %s236
      %p248 = scmp.eq.s32.totalorder %s43, 1
      %p249 = por %p247, %p248
      %p251 = scmp.ne.s32.totalorder %s236, %s250
      %p252 = scmp.eq.s32.totalorder %s43, 0
      %p253 = por %p251, %p252
      %s255 = sadd.s32 %s254, 1
      %p258 = scmp.eq.s32.totalorder %s37, 1
      %p259 = scmp.ne.s32.totalorder %s254, %s256
      %p260 = scmp.eq.s32.totalorder %s37, 0
      %p261 = por %p259, %p260
      %p262 = scmp.ne.s32.totalorder %s254, %s256
      %p263 = scmp.eq.s32.totalorder %s42, 1
      %p264 = por %p262, %p263
      %p265 = scmp.ne.s32.totalorder %s256, %s257
      %p266 = scmp.eq.s32.totalorder %s42, 0
      %p267 = por %p265, %p266
      %p268 = scmp.ne.s32.totalorder %s256, %s257
      %p269 = scmp.eq.s32.totalorder %s43, 1
      %p270 = por %p268, %p269
      %p272 = scmp.ne.s32.totalorder %s257, %s271
      %p273 = scmp.eq.s32.totalorder %s43, 0
      %p274 = por %p272, %p273
      %s276 = sadd.s32 %s275, 1
      %p279 = scmp.eq.s32.totalorder %s37, 1
      %p280 = scmp.ne.s32.totalorder %s275, %s277
      %p281 = scmp.eq.s32.totalorder %s37, 0
      %p282 = por %p280, %p281
      %p283 = scmp.ne.s32.totalorder %s275, %s277
      %p284 = scmp.eq.s32.totalorder %s42, 1
      %p285 = por %p283, %p284
      %p286 = scmp.ne.s32.totalorder %s277, %s278
      %p287 = scmp.eq.s32.totalorder %s42, 0
      %p288 = por %p286, %p287
      %p289 = scmp.ne.s32.totalorder %s277, %s278
      %p290 = scmp.eq.s32.totalorder %s43, 1
      %p291 = por %p289, %p290
      %p293 = scmp.ne.s32.totalorder %s278, %s292
      %p294 = scmp.eq.s32.totalorder %s43, 0
      %p295 = por %p293, %p294
      %s296 = ssub.s32 %s37, %s44
      %p297 = scmp.eq.s32.totalorder %s296, 0
      %s299 = sadd.s32 %s298, 1
      %s300 = scalar_select %p297, %s298, %s299
      %p303 = pneg %p297
      %p304 = scmp.eq.s32.totalorder %s37, 1
      %p305 = por %p303, %p304
      %p306 = scmp.ne.s32.totalorder %s298, %s301
      %p307 = scmp.eq.s32.totalorder %s37, 0
      %p308 = por %p306, %p307
      %p309 = scmp.ne.s32.totalorder %s298, %s301
      %p310 = scmp.eq.s32.totalorder %s42, 1
      %p311 = por %p309, %p310
      %p312 = scmp.ne.s32.totalorder %s301, %s302
      %p313 = scmp.eq.s32.totalorder %s42, 0
      %p314 = por %p312, %p313
      %p315 = scmp.ne.s32.totalorder %s301, %s302
      %p316 = scmp.eq.s32.totalorder %s43, 1
      %p317 = por %p315, %p316
      %p319 = scmp.ne.s32.totalorder %s302, %s318
      %p320 = scmp.eq.s32.totalorder %s43, 0
      %p321 = por %p319, %p320
      %s322 = ssub.s32 %s37, %s44
      %p323 = scmp.eq.s32.totalorder %s322, 0
      %s325 = sadd.s32 %s324, 1
      %s326 = scalar_select %p323, %s324, %s325
      %p329 = pneg %p323
      %p330 = scmp.eq.s32.totalorder %s37, 1
      %p331 = por %p329, %p330
      %p332 = scmp.ne.s32.totalorder %s324, %s327
      %p333 = scmp.eq.s32.totalorder %s37, 0
      %p334 = por %p332, %p333
      %p335 = scmp.ne.s32.totalorder %s324, %s327
      %p336 = scmp.eq.s32.totalorder %s42, 1
      %p337 = por %p335, %p336
      %p338 = scmp.ne.s32.totalorder %s327, %s328
      %p339 = scmp.eq.s32.totalorder %s42, 0
      %p340 = por %p338, %p339
      %p341 = scmp.ne.s32.totalorder %s327, %s328
      %p342 = scmp.eq.s32.totalorder %s43, 1
      %p343 = por %p341, %p342
      %p345 = scmp.ne.s32.totalorder %s328, %s344
      %p346 = scmp.eq.s32.totalorder %s43, 0
      %p347 = por %p345, %p346
      %s348 = ssub.s32 %s37, %s44
      %p349 = scmp.eq.s32.totalorder %s348, 0
      %s351 = sadd.s32 %s350, 1
      %s352 = scalar_select %p349, %s350, %s351
      %p355 = pneg %p349
      %p356 = scmp.eq.s32.totalorder %s37, 1
      %p357 = por %p355, %p356
      %p358 = scmp.ne.s32.totalorder %s350, %s353
      %p359 = scmp.eq.s32.totalorder %s37, 0
      %p360 = por %p358, %p359
      %p361 = scmp.ne.s32.totalorder %s350, %s353
      %p362 = scmp.eq.s32.totalorder %s42, 1
      %p363 = por %p361, %p362
      %p364 = scmp.ne.s32.totalorder %s353, %s354
      %p365 = scmp.eq.s32.totalorder %s42, 0
      %p366 = por %p364, %p365
      %p367 = scmp.ne.s32.totalorder %s353, %s354
      %p368 = scmp.eq.s32.totalorder %s43, 1
      %p369 = por %p367, %p368
      %p371 = scmp.ne.s32.totalorder %s354, %s370
      %p372 = scmp.eq.s32.totalorder %s43, 0
      %p373 = por %p371, %p372
      %p374 = scmp.le.s32.totalorder 1, %s37
      %p375 = scmp.lt.s32.totalorder %s37, 3
      %p376 = pnand %p374, %p375
      %p377 = pneg %p376
      // Predicated region
      $region9: #{tpu_custom_call.1} parent=5 // pred_check
        _
      $region10: #{tpu_custom_call.1} parent=5 // pred_check_branch
        %379 = sbr.rel (%p376) target = $region12
      $region11: #{tpu_custom_call.1} parent=5 // pred_region
        %s380 = ssub.s32 %s37, 1
        // Predicated region
        $region13: #{tpu_custom_call.1} parent=11 // pred_check
          %p381 = pneg %p162
        $region14: #{tpu_custom_call.1} parent=11 // pred_check_branch
          %383 = sbr.rel (%p381) target = $region16
        $region15: #{tpu_custom_call.1} parent=11 // pred_region
          %s385 = ssub.s32 256, 256
          %386 = vsyncadd [#allocation9], %s385
          %s387 = sshll.u32 [#allocation10], 4
          %s388 = int_to_ptr.vmem [resolvable:$true] %s387
          %393 = dma.hbm_to_vmem [thread:$0]  %s4, 256, %s388, [#allocation9], 128, 128, 8
        $region16: #{tpu_custom_call.1} parent=11 // pred_fallthru
          _
        // Predicated region
        $region17: #{tpu_custom_call.1} parent=11 // pred_check
          %p394 = pneg %p183
        $region18: #{tpu_custom_call.1} parent=11 // pred_check_branch
          %396 = sbr.rel (%p394) target = $region20
        $region19: #{tpu_custom_call.1} parent=11 // pred_region
          _
        $region20: #{tpu_custom_call.1} parent=11 // pred_fallthru
          _
        // Predicated region
        $region21: #{tpu_custom_call.1} parent=11 // pred_check
          %p397 = pneg %p204
        $region22: #{tpu_custom_call.1} parent=11 // pred_check_branch
          %399 = sbr.rel (%p397) target = $region24
        $region23: #{tpu_custom_call.1} parent=11 // pred_region
          %s401 = ssub.s32 8192, 8192
          %402 = vsyncadd [#allocation12], %s401
          %s403 = sshll.u32 [#allocation11], 4
          %s404 = int_to_ptr.vmem [resolvable:$true] %s403
          %409 = dma.hbm_to_vmem [thread:$0]  %s6, 8192, %s404, [#allocation12], 512, 512, 32
        $region24: #{tpu_custom_call.1} parent=11 // pred_fallthru
          _
        // Predicated region
        $region25: #{tpu_custom_call.1} parent=11 // pred_check
          %p410 = pneg %p225
        $region26: #{tpu_custom_call.1} parent=11 // pred_check_branch
          %412 = sbr.rel (%p410) target = $region28
        $region27: #{tpu_custom_call.1} parent=11 // pred_region
          %s414 = ssub.s32 8192, 8192
          %415 = vsyncadd [#allocation12], %s414
          %s416 = sshll.u32 [#allocation13], 4
          %s417 = int_to_ptr.vmem [resolvable:$true] %s416
          %422 = dma.hbm_to_vmem [thread:$0]  %s7, 8192, %s417, [#allocation12], 512, 512, 32
        $region28: #{tpu_custom_call.1} parent=11 // pred_fallthru
          _
        // Predicated region
        $region29: #{tpu_custom_call.1} parent=11 // pred_check
          %p423 = pneg %p246
        $region30: #{tpu_custom_call.1} parent=11 // pred_check_branch
          %425 = sbr.rel (%p423) target = $region32
        $region31: #{tpu_custom_call.1} parent=11 // pred_region
          _
        $region32: #{tpu_custom_call.1} parent=11 // pred_fallthru
          _
        // Predicated region
        $region33: #{tpu_custom_call.1} parent=11 // pred_check
          %p426 = pneg %p267
        $region34: #{tpu_custom_call.1} parent=11 // pred_check_branch
          %428 = sbr.rel (%p426) target = $region36
        $region35: #{tpu_custom_call.1} parent=11 // pred_region
          %s430 = ssub.s32 2048, 2048
          %431 = vsyncadd [#allocation15], %s430
          %s432 = sshll.u32 [#allocation14], 4
          %s433 = int_to_ptr.vmem [resolvable:$true] %s432
          %438 = dma.hbm_to_vmem [thread:$0]  %s9, 2048, %s433, [#allocation15], 128, 128, 8
        $region36: #{tpu_custom_call.1} parent=11 // pred_fallthru
          _
        // Predicated region
        $region37: #{tpu_custom_call.1} parent=11 // pred_check
          %p439 = pneg %p288
        $region38: #{tpu_custom_call.1} parent=11 // pred_check_branch
          %441 = sbr.rel (%p439) target = $region40
        $region39: #{tpu_custom_call.1} parent=11 // pred_region
          _
        $region40: #{tpu_custom_call.1} parent=11 // pred_fallthru
          _
      $region12: #{tpu_custom_call.1} parent=5 // pred_fallthru
        _
      %p442 = scmp.lt.s32.totalorder %s37, 2
      // Predicated region
      $region41: #{tpu_custom_call.1} parent=5 // pred_check
        %p443 = pneg %p442
      $region42: #{tpu_custom_call.1} parent=5 // pred_check_branch
        %445 = sbr.rel (%p443) target = $region44
      $region43: #{tpu_custom_call.1} parent=5 // pred_region
        // Predicated region
        $region45: #{tpu_custom_call.1} parent=43 // pred_check
          %p446 = pneg %p57
        $region46: #{tpu_custom_call.1} parent=43 // pred_check_branch
          %448 = sbr.rel (%p446) target = $region48
        $region47: #{tpu_custom_call.1} parent=43 // pred_region
          %s449 = sand.u32 %s47, 1
          %s450 = scalar_lea.sflag [#allocation3], %s449
          %s451 = sand.u32 %s47, 1
          %s452 = smul.addr %s451, 8
          %s453 = scalar_lea.vmem [#allocation2], %s452
          %s455 = ssub.s32 128, 128
          %456 = vsyncadd %s450, %s455
          %s457 = smul.addr %s37, 128
          %s458 = scalar_lea.hbm %s0, %s457
          %s460 = sshll.u32 %s453, 4
          %s461 = int_to_ptr.vmem [resolvable:$true] %s460
          %463 = dma.hbm_to_vmem [thread:$0]  %s458, 128, %s461, %s450
        $region48: #{tpu_custom_call.1} parent=43 // pred_fallthru
          _
        // Predicated region
        $region49: #{tpu_custom_call.1} parent=43 // pred_check
          %p464 = pneg %p83
        $region50: #{tpu_custom_call.1} parent=43 // pred_check_branch
          %466 = sbr.rel (%p464) target = $region52
        $region51: #{tpu_custom_call.1} parent=43 // pred_region
          %s467 = sand.u32 %s37, 1
          %s468 = scalar_lea.sflag [#allocation6], %s467
          %s469 = sand.u32 %s73, 1
          %s470 = smul.addr %s469, 8
          %s471 = scalar_lea.vmem [#allocation5], %s470
          %s473 = ssub.s32 128, 128
          %474 = vsyncadd %s468, %s473
          %s475 = smul.addr %s37, 128
          %s476 = scalar_lea.hbm %s1, %s475
          %s478 = sshll.u32 %s471, 4
          %s479 = int_to_ptr.vmem [resolvable:$true] %s478
          %481 = dma.hbm_to_vmem [thread:$0]  %s476, 128, %s479, %s468
        $region52: #{tpu_custom_call.1} parent=43 // pred_fallthru
          _
        // Predicated region
        $region53: #{tpu_custom_call.1} parent=43 // pred_check
          %p482 = pneg %p109
        $region54: #{tpu_custom_call.1} parent=43 // pred_check_branch
          %484 = sbr.rel (%p482) target = $region56
        $region55: #{tpu_custom_call.1} parent=43 // pred_region
          %s485 = sand.u32 %s37, 1
          %s486 = scalar_lea.sflag [#allocation6], %s485
          %s487 = sand.u32 %s99, 1
          %s488 = smul.addr %s487, 8
          %s489 = scalar_lea.vmem [#allocation7], %s488
          %s491 = ssub.s32 128, 128
          %492 = vsyncadd %s486, %s491
          %s493 = smul.addr %s37, 128
          %s494 = scalar_lea.hbm %s2, %s493
          %s496 = sshll.u32 %s489, 4
          %s497 = int_to_ptr.vmem [resolvable:$true] %s496
          %499 = dma.hbm_to_vmem [thread:$0]  %s494, 128, %s497, %s486
        $region56: #{tpu_custom_call.1} parent=43 // pred_fallthru
          _
        // Predicated region
        $region57: #{tpu_custom_call.1} parent=43 // pred_check
          %p500 = pneg %p135
        $region58: #{tpu_custom_call.1} parent=43 // pred_check_branch
          %502 = sbr.rel (%p500) target = $region60
        $region59: #{tpu_custom_call.1} parent=43 // pred_region
          %s503 = sand.u32 %s37, 1
          %s504 = scalar_lea.sflag [#allocation9], %s503
          %s505 = sand.u32 %s125, 1
          %s506 = smul.addr %s505, 8
          %s507 = scalar_lea.vmem [#allocation8], %s506
          %s509 = ssub.s32 128, 128
          %510 = vsyncadd %s504, %s509
          %s511 = smul.addr %s37, 128
          %s512 = scalar_lea.hbm %s3, %s511
          %s514 = sshll.u32 %s507, 4
          %s515 = int_to_ptr.vmem [resolvable:$true] %s514
          %517 = dma.hbm_to_vmem [thread:$0]  %s512, 128, %s515, %s504
        $region60: #{tpu_custom_call.1} parent=43 // pred_fallthru
          _
      $region44: #{tpu_custom_call.1} parent=5 // pred_fallthru
        _
      %p518 = scmp.le.s32.totalorder 1, %s37
      %p519 = scmp.lt.s32.totalorder %s37, 3
      %p520 = pnand %p518, %p519
      %p521 = pneg %p520
      // Predicated region
      $region61: #{tpu_custom_call.1} parent=5 // pred_check
        _
      $region62: #{tpu_custom_call.1} parent=5 // pred_check_branch
        %523 = sbr.rel (%p520) target = $region64
      $region63: #{tpu_custom_call.1} parent=5 // pred_region
        %s524 = ssub.s32 %s37, 1
        %s525 = sand.u32 %s50, 1
        %s526 = scalar_lea.sflag [#allocation3], %s525
        %s527 = sand.u32 %s50, 1
        %s528 = smul.addr %s527, 8
        %s529 = scalar_lea.vmem [#allocation2], %s528
        // Predicated region
        $region65: #{tpu_custom_call.1} parent=63 // pred_check
          %p530 = pneg %p63
        $region66: #{tpu_custom_call.1} parent=63 // pred_check_branch
          %532 = sbr.rel (%p530) target = $region68
        $region67: #{tpu_custom_call.1} parent=63 // pred_region
          %533 = dma.done %s526, 128
        $region68: #{tpu_custom_call.1} parent=63 // pred_fallthru
          _
        %s534 = sand.u32 %s42, 1
        %s535 = scalar_lea.sflag [#allocation6], %s534
        %s536 = sand.u32 %s76, 1
        %s537 = smul.addr %s536, 8
        %s538 = scalar_lea.vmem [#allocation5], %s537
        // Predicated region
        $region69: #{tpu_custom_call.1} parent=63 // pred_check
          %p539 = pneg %p89
        $region70: #{tpu_custom_call.1} parent=63 // pred_check_branch
          %541 = sbr.rel (%p539) target = $region72
        $region71: #{tpu_custom_call.1} parent=63 // pred_region
          %542 = dma.done %s535, 128
        $region72: #{tpu_custom_call.1} parent=63 // pred_fallthru
          _
        %s543 = sand.u32 %s42, 1
        %s544 = scalar_lea.sflag [#allocation6], %s543
        %s545 = sand.u32 %s102, 1
        %s546 = smul.addr %s545, 8
        %s547 = scalar_lea.vmem [#allocation7], %s546
        // Predicated region
        $region73: #{tpu_custom_call.1} parent=63 // pred_check
          %p548 = pneg %p115
        $region74: #{tpu_custom_call.1} parent=63 // pred_check_branch
          %550 = sbr.rel (%p548) target = $region76
        $region75: #{tpu_custom_call.1} parent=63 // pred_region
          %551 = dma.done %s544, 128
        $region76: #{tpu_custom_call.1} parent=63 // pred_fallthru
          _
        %s552 = sand.u32 %s42, 1
        %s553 = scalar_lea.sflag [#allocation9], %s552
        %s554 = sand.u32 %s128, 1
        %s555 = smul.addr %s554, 8
        %s556 = scalar_lea.vmem [#allocation8], %s555
        // Predicated region
        $region77: #{tpu_custom_call.1} parent=63 // pred_check
          %p557 = pneg %p141
        $region78: #{tpu_custom_call.1} parent=63 // pred_check_branch
          %559 = sbr.rel (%p557) target = $region80
        $region79: #{tpu_custom_call.1} parent=63 // pred_region
          %560 = dma.done %s553, 128
        $region80: #{tpu_custom_call.1} parent=63 // pred_fallthru
          _
        // Predicated region
        $region81: #{tpu_custom_call.1} parent=63 // pred_check
          %p561 = pneg %p162
        $region82: #{tpu_custom_call.1} parent=63 // pred_check_branch
          %563 = sbr.rel (%p561) target = $region84
        $region83: #{tpu_custom_call.1} parent=63 // pred_region
          %564 = dma.done [#allocation9], 256
        $region84: #{tpu_custom_call.1} parent=63 // pred_fallthru
          _
        // Predicated region
        $region85: #{tpu_custom_call.1} parent=63 // pred_check
          %p565 = pneg %p204
        $region86: #{tpu_custom_call.1} parent=63 // pred_check_branch
          %567 = sbr.rel (%p565) target = $region88
        $region87: #{tpu_custom_call.1} parent=63 // pred_region
          %568 = dma.done [#allocation12], 8192
        $region88: #{tpu_custom_call.1} parent=63 // pred_fallthru
          _
        // Predicated region
        $region89: #{tpu_custom_call.1} parent=63 // pred_check
          %p569 = pneg %p225
        $region90: #{tpu_custom_call.1} parent=63 // pred_check_branch
          %571 = sbr.rel (%p569) target = $region92
        $region91: #{tpu_custom_call.1} parent=63 // pred_region
          %572 = dma.done [#allocation12], 8192
        $region92: #{tpu_custom_call.1} parent=63 // pred_fallthru
          _
        // Predicated region
        $region93: #{tpu_custom_call.1} parent=63 // pred_check
          %p573 = pneg %p267
        $region94: #{tpu_custom_call.1} parent=63 // pred_check_branch
          %575 = sbr.rel (%p573) target = $region96
        $region95: #{tpu_custom_call.1} parent=63 // pred_region
          %576 = dma.done [#allocation15], 2048
        $region96: #{tpu_custom_call.1} parent=63 // pred_fallthru
          _
        %s577 = sand.u32 %s50, 1
        %s578 = scalar_lea.sflag [#allocation3], %s577
        %s579 = sand.u32 %s50, 1
        %s580 = smul.addr %s579, 8
        %s581 = scalar_lea.vmem [#allocation2], %s580
        %p582 = pneg %p63
        %p583 = pneg %p60
        %s584 = sand.u32 %s42, 1
        %s585 = scalar_lea.sflag [#allocation6], %s584
        %s586 = sand.u32 %s76, 1
        %s587 = smul.addr %s586, 8
        %s588 = scalar_lea.vmem [#allocation5], %s587
        %p589 = pneg %p89
        %p590 = pneg %p86
        %s591 = sand.u32 %s42, 1
        %s592 = scalar_lea.sflag [#allocation6], %s591
        %s593 = sand.u32 %s102, 1
        %s594 = smul.addr %s593, 8
        %s595 = scalar_lea.vmem [#allocation7], %s594
        %p596 = pneg %p115
        %p597 = pneg %p112
        %s598 = sand.u32 %s42, 1
        %s599 = scalar_lea.sflag [#allocation9], %s598
        %s600 = sand.u32 %s128, 1
        %s601 = smul.addr %s600, 8
        %s602 = scalar_lea.vmem [#allocation8], %s601
        %p603 = pneg %p141
        %p604 = pneg %p138
        %p605 = pneg %p162
        %p606 = pneg %p159
        %p607 = pneg %p183
        %p608 = pneg %p180
        %p609 = pneg %p204
        %p610 = pneg %p201
        %p611 = pneg %p225
        %p612 = pneg %p222
        %p613 = pneg %p246
        %p614 = pneg %p243
        %p615 = pneg %p267
        %p616 = pneg %p264
        %p617 = pneg %p288
        %p618 = pneg %p285
        %p619 = pneg %p314
        %p620 = pneg %p311
        %s621 = sand.u32 %s301, 1
        %s622 = scalar_lea.sflag [#allocation4], %s621
        %s623 = sand.u32 %s301, 1
        %s624 = smul.addr %s623, 8
        %s625 = scalar_lea.vmem [#allocation16], %s624
        %p626 = pneg %p340
        %p627 = pneg %p337
        %s628 = sand.u32 %s42, 1
        %s629 = scalar_lea.sflag [#allocation18], %s628
        %s630 = sand.u32 %s327, 1
        %s631 = smul.addr %s630, 8
        %s632 = scalar_lea.vmem [#allocation17], %s631
        %p633 = pneg %p366
        %p634 = pneg %p363
        %s635 = sand.u32 %s42, 1
        %s636 = scalar_lea.sflag [#allocation18], %s635
        %s637 = sand.u32 %s353, 1
        %s638 = smul.addr %s637, 8
        %s639 = scalar_lea.vmem [#allocation19], %s638
        %v640 = vld [vmem:[%s529] sm:$0xff]
        %v641 = vld [vmem:[%s538] sm:$0xff]
        %v642 = vld [vmem:[%s547] sm:$0xff]
        %v643 = vld [vmem:[#allocation10] sm:$0xff]
        %v644 = vld [vmem:[#allocation10 + $0x8] sm:$0xff]
        %v645 = vld [vmem:[%s5] sm:$0x1]
        %v647 = vlaneseq
        %v648 = vshrl.u32 %v647, 7
        %v649 = vsub.s32 0, %v648
        %v650 = vrot.slane %v645, %v649
        %vm652 = vcmask 130048
        %v654 = vsel %vm652, %v640, 0
        %656 = vmatprep.subr.mxu0 0.0
        %657 = vmatpush1.msra.mxu0 %v643
        %658 = vmatprep.subr.mxu0 0.0
        %659 = vmatpush1.msra.mxu0 %v644
        %660 = vmatprep.subr.mxu0 0.0
        %661 = vmatpush1.msra.mxu0 0.0
        %662 = vmatprep.subr.mxu0 0.0
        %663 = vmatpush1.msra.mxu0 0.0
        %664 = vmatprep.subr.mxu0 0.0
        %665 = vmatpush1.msra.mxu0 0.0
        %666 = vmatprep.subr.mxu0 0.0
        %667 = vmatpush1.msra.mxu0 0.0
        %668 = vmatprep.subr.mxu0 0.0
        %669 = vmatpush1.msra.mxu0 0.0
        %670 = vmatprep.subr.mxu0 0.0
        %671 = vmatpush1.msra.mxu0 0.0
        %672 = vmatprep.subr.mxu0 0.0
        %673 = vmatpush1.msra.mxu0 0.0
        %674 = vmatprep.subr.mxu0 0.0
        %675 = vmatpush1.msra.mxu0 0.0
        %676 = vmatprep.subr.mxu0 0.0
        %677 = vmatpush1.msra.mxu0 0.0
        %678 = vmatprep.subr.mxu0 0.0
        %679 = vmatpush1.msra.mxu0 0.0
        %680 = vmatprep.subr.mxu0 0.0
        %681 = vmatpush1.msra.mxu0 0.0
        %682 = vmatprep.subr.mxu0 0.0
        %683 = vmatpush1.msra.mxu0 0.0
        %684 = vmatprep.subr.mxu0 0.0
        %685 = vmatpush1.msra.mxu0 0.0
        %686 = vmatprep.subr.mxu0 0.0
        %687 = vmatpush1.msra.mxu0 0.0
        %688 = vmatprep.subr.mxu0 0.0
        %689 = vmatpush1.msra.mxu0 0.0
        %690 = vmatprep.subr.mxu0 0.0
        %691 = vmatpush1.msra.mxu0 0.0
        %692 = vmatprep.subr.mxu0 0.0
        %693 = vmatpush1.msra.mxu0 0.0
        %694 = vmatprep.subr.mxu0 0.0
        %695 = vmatpush1.msra.mxu0 0.0
        %696 = vmatprep.subr.mxu0 0.0
        %697 = vmatpush1.msra.mxu0 0.0
        %698 = vmatprep.subr.mxu0 0.0
        %699 = vmatpush1.msra.mxu0 0.0
        %700 = vmatprep.subr.mxu0 0.0
        %701 = vmatpush1.msra.mxu0 0.0
        %702 = vmatprep.subr.mxu0 0.0
        %703 = vmatpush1.msra.mxu0 0.0
        %704 = vmatprep.subr.mxu0 0.0
        %705 = vmatpush1.msra.mxu0 0.0
        %706 = vmatprep.subr.mxu0 0.0
        %707 = vmatpush1.msra.mxu0 0.0
        %708 = vmatprep.subr.mxu0 0.0
        %709 = vmatpush1.msra.mxu0 0.0
        %710 = vmatprep.subr.mxu0 0.0
        %711 = vmatpush1.msra.mxu0 0.0
        %712 = vmatprep.subr.mxu0 0.0
        %713 = vmatpush1.msra.mxu0 0.0
        %714 = vmatprep.subr.mxu0 0.0
        %715 = vmatpush1.msra.mxu0 0.0
        %716 = vmatprep.subr.mxu0 0.0
        %717 = vmatpush1.msra.mxu0 0.0
        %718 = vmatprep.subr.mxu0 0.0
        %719 = vmatpush1.msra.mxu0 0.0
        %720 = vmatprep.mubr.f32.mxu0 0.0
        %721 = vmatmul.mubr.f32.gmra.mrb[0].mxu0 %v654
        %v722 = vpop.f32.mrb[0].mxu0
        %v723 = vadd.f32 %v650, %v722
        %v724 = vpop.f32.mrb[0].mxu0
        %725 = vdwg.mxu0
        %v726 = vmax.f32 %v723, 0.0
        %v727 = vld [vmem:[#allocation11] sm:$0xff]
        %v728 = vld [vmem:[#allocation11 + $0x8] sm:$0xff]
        %v729 = vld [vmem:[#allocation11 + $0x10] sm:$0xff]
        %v730 = vld [vmem:[#allocation11 + $0x18] sm:$0xff]
        %v731 = vld [vmem:[#allocation11 + $0x20] sm:$0xff]
        %v732 = vld [vmem:[#allocation11 + $0x28] sm:$0xff]
        %v733 = vld [vmem:[#allocation11 + $0x30] sm:$0xff]
        %v734 = vld [vmem:[#allocation11 + $0x38] sm:$0xff]
        %v735 = vld [vmem:[#allocation11 + $0x40] sm:$0xff]
        %v736 = vld [vmem:[#allocation11 + $0x48] sm:$0xff]
        %v737 = vld [vmem:[#allocation11 + $0x50] sm:$0xff]
        %v738 = vld [vmem:[#allocation11 + $0x58] sm:$0xff]
        %v739 = vld [vmem:[#allocation11 + $0x60] sm:$0xff]
        %v740 = vld [vmem:[#allocation11 + $0x68] sm:$0xff]
        %v741 = vld [vmem:[#allocation11 + $0x70] sm:$0xff]
        %v742 = vld [vmem:[#allocation11 + $0x78] sm:$0xff]
        %v743 = vld [vmem:[#allocation11 + $0x80] sm:$0xff]
        %v744 = vld [vmem:[#allocation11 + $0x88] sm:$0xff]
        %v745 = vld [vmem:[#allocation11 + $0x90] sm:$0xff]
        %v746 = vld [vmem:[#allocation11 + $0x98] sm:$0xff]
        %v747 = vld [vmem:[#allocation11 + $0xa0] sm:$0xff]
        %v748 = vld [vmem:[#allocation11 + $0xa8] sm:$0xff]
        %v749 = vld [vmem:[#allocation11 + $0xb0] sm:$0xff]
        %v750 = vld [vmem:[#allocation11 + $0xb8] sm:$0xff]
        %v751 = vld [vmem:[#allocation11 + $0xc0] sm:$0xff]
        %v752 = vld [vmem:[#allocation11 + $0xc8] sm:$0xff]
        %v753 = vld [vmem:[#allocation11 + $0xd0] sm:$0xff]
        %v754 = vld [vmem:[#allocation11 + $0xd8] sm:$0xff]
        %v755 = vld [vmem:[#allocation11 + $0xe0] sm:$0xff]
        %v756 = vld [vmem:[#allocation11 + $0xe8] sm:$0xff]
        %v757 = vld [vmem:[#allocation11 + $0xf0] sm:$0xff]
        %v758 = vld [vmem:[#allocation11 + $0xf8] sm:$0xff]
        %v759 = vld [vmem:[#allocation11 + $0x100] sm:$0xff]
        %v760 = vld [vmem:[#allocation11 + $0x108] sm:$0xff]
        %v761 = vld [vmem:[#allocation11 + $0x110] sm:$0xff]
        %v762 = vld [vmem:[#allocation11 + $0x118] sm:$0xff]
        %v763 = vld [vmem:[#allocation11 + $0x120] sm:$0xff]
        %v764 = vld [vmem:[#allocation11 + $0x128] sm:$0xff]
        %v765 = vld [vmem:[#allocation11 + $0x130] sm:$0xff]
        %v766 = vld [vmem:[#allocation11 + $0x138] sm:$0xff]
        %v767 = vld [vmem:[#allocation11 + $0x140] sm:$0xff]
        %v768 = vld [vmem:[#allocation11 + $0x148] sm:$0xff]
        %v769 = vld [vmem:[#allocation11 + $0x150] sm:$0xff]
        %v770 = vld [vmem:[#allocation11 + $0x158] sm:$0xff]
        %v771 = vld [vmem:[#allocation11 + $0x160] sm:$0xff]
        %v772 = vld [vmem:[#allocation11 + $0x168] sm:$0xff]
        %v773 = vld [vmem:[#allocation11 + $0x170] sm:$0xff]
        %v774 = vld [vmem:[#allocation11 + $0x178] sm:$0xff]
        %v775 = vld [vmem:[#allocation11 + $0x180] sm:$0xff]
        %v776 = vld [vmem:[#allocation11 + $0x188] sm:$0xff]
        %v777 = vld [vmem:[#allocation11 + $0x190] sm:$0xff]
        %v778 = vld [vmem:[#allocation11 + $0x198] sm:$0xff]
        %v779 = vld [vmem:[#allocation11 + $0x1a0] sm:$0xff]
        %v780 = vld [vmem:[#allocation11 + $0x1a8] sm:$0xff]
        %v781 = vld [vmem:[#allocation11 + $0x1b0] sm:$0xff]
        %v782 = vld [vmem:[#allocation11 + $0x1b8] sm:$0xff]
        %v783 = vld [vmem:[#allocation11 + $0x1c0] sm:$0xff]
        %v784 = vld [vmem:[#allocation11 + $0x1c8] sm:$0xff]
        %v785 = vld [vmem:[#allocation11 + $0x1d0] sm:$0xff]
        %v786 = vld [vmem:[#allocation11 + $0x1d8] sm:$0xff]
        %v787 = vld [vmem:[#allocation11 + $0x1e0] sm:$0xff]
        %v788 = vld [vmem:[#allocation11 + $0x1e8] sm:$0xff]
        %v789 = vld [vmem:[#allocation11 + $0x1f0] sm:$0xff]
        %v790 = vld [vmem:[#allocation11 + $0x1f8] sm:$0xff]
        %v791 = vld [vmem:[#allocation13] sm:$0xff]
        %v792 = vld [vmem:[#allocation13 + $0x8] sm:$0xff]
        %v793 = vld [vmem:[#allocation13 + $0x10] sm:$0xff]
        %v794 = vld [vmem:[#allocation13 + $0x18] sm:$0xff]
        %v795 = vld [vmem:[#allocation13 + $0x20] sm:$0xff]
        %v796 = vld [vmem:[#allocation13 + $0x28] sm:$0xff]
        %v797 = vld [vmem:[#allocation13 + $0x30] sm:$0xff]
        %v798 = vld [vmem:[#allocation13 + $0x38] sm:$0xff]
        %v799 = vld [vmem:[#allocation13 + $0x40] sm:$0xff]
        %v800 = vld [vmem:[#allocation13 + $0x48] sm:$0xff]
        %v801 = vld [vmem:[#allocation13 + $0x50] sm:$0xff]
        %v802 = vld [vmem:[#allocation13 + $0x58] sm:$0xff]
        %v803 = vld [vmem:[#allocation13 + $0x60] sm:$0xff]
        %v804 = vld [vmem:[#allocation13 + $0x68] sm:$0xff]
        %v805 = vld [vmem:[#allocation13 + $0x70] sm:$0xff]
        %v806 = vld [vmem:[#allocation13 + $0x78] sm:$0xff]
        %v807 = vld [vmem:[#allocation13 + $0x80] sm:$0xff]
        %v808 = vld [vmem:[#allocation13 + $0x88] sm:$0xff]
        %v809 = vld [vmem:[#allocation13 + $0x90] sm:$0xff]
        %v810 = vld [vmem:[#allocation13 + $0x98] sm:$0xff]
        %v811 = vld [vmem:[#allocation13 + $0xa0] sm:$0xff]
        %v812 = vld [vmem:[#allocation13 + $0xa8] sm:$0xff]
        %v813 = vld [vmem:[#allocation13 + $0xb0] sm:$0xff]
        %v814 = vld [vmem:[#allocation13 + $0xb8] sm:$0xff]
        %v815 = vld [vmem:[#allocation13 + $0xc0] sm:$0xff]
        %v816 = vld [vmem:[#allocation13 + $0xc8] sm:$0xff]
        %v817 = vld [vmem:[#allocation13 + $0xd0] sm:$0xff]
        %v818 = vld [vmem:[#allocation13 + $0xd8] sm:$0xff]
        %v819 = vld [vmem:[#allocation13 + $0xe0] sm:$0xff]
        %v820 = vld [vmem:[#allocation13 + $0xe8] sm:$0xff]
        %v821 = vld [vmem:[#allocation13 + $0xf0] sm:$0xff]
        %v822 = vld [vmem:[#allocation13 + $0xf8] sm:$0xff]
        %v823 = vld [vmem:[#allocation13 + $0x100] sm:$0xff]
        %v824 = vld [vmem:[#allocation13 + $0x108] sm:$0xff]
        %v825 = vld [vmem:[#allocation13 + $0x110] sm:$0xff]
        %v826 = vld [vmem:[#allocation13 + $0x118] sm:$0xff]
        %v827 = vld [vmem:[#allocation13 + $0x120] sm:$0xff]
        %v828 = vld [vmem:[#allocation13 + $0x128] sm:$0xff]
        %v829 = vld [vmem:[#allocation13 + $0x130] sm:$0xff]
        %v830 = vld [vmem:[#allocation13 + $0x138] sm:$0xff]
        %v831 = vld [vmem:[#allocation13 + $0x140] sm:$0xff]
        %v832 = vld [vmem:[#allocation13 + $0x148] sm:$0xff]
        %v833 = vld [vmem:[#allocation13 + $0x150] sm:$0xff]
        %v834 = vld [vmem:[#allocation13 + $0x158] sm:$0xff]
        %v835 = vld [vmem:[#allocation13 + $0x160] sm:$0xff]
        %v836 = vld [vmem:[#allocation13 + $0x168] sm:$0xff]
        %v837 = vld [vmem:[#allocation13 + $0x170] sm:$0xff]
        %v838 = vld [vmem:[#allocation13 + $0x178] sm:$0xff]
        %v839 = vld [vmem:[#allocation13 + $0x180] sm:$0xff]
        %v840 = vld [vmem:[#allocation13 + $0x188] sm:$0xff]
        %v841 = vld [vmem:[#allocation13 + $0x190] sm:$0xff]
        %v842 = vld [vmem:[#allocation13 + $0x198] sm:$0xff]
        %v843 = vld [vmem:[#allocation13 + $0x1a0] sm:$0xff]
        %v844 = vld [vmem:[#allocation13 + $0x1a8] sm:$0xff]
        %v845 = vld [vmem:[#allocation13 + $0x1b0] sm:$0xff]
        %v846 = vld [vmem:[#allocation13 + $0x1b8] sm:$0xff]
        %v847 = vld [vmem:[#allocation13 + $0x1c0] sm:$0xff]
        %v848 = vld [vmem:[#allocation13 + $0x1c8] sm:$0xff]
        %v849 = vld [vmem:[#allocation13 + $0x1d0] sm:$0xff]
        %v850 = vld [vmem:[#allocation13 + $0x1d8] sm:$0xff]
        %v851 = vld [vmem:[#allocation13 + $0x1e0] sm:$0xff]
        %v852 = vld [vmem:[#allocation13 + $0x1e8] sm:$0xff]
        %v853 = vld [vmem:[#allocation13 + $0x1f0] sm:$0xff]
        %v854 = vld [vmem:[#allocation13 + $0x1f8] sm:$0xff]
        %855 = vmatprep.subr.mxu0 %v792
        %856 = vmatpush1.msra.mxu0 %v791
        %857 = vmatprep.subr.mxu0 %v796
        %858 = vmatpush1.msra.mxu0 %v795
        %859 = vmatprep.subr.mxu0 %v800
        %860 = vmatpush1.msra.mxu0 %v799
        %861 = vmatprep.subr.mxu0 %v804
        %862 = vmatpush1.msra.mxu0 %v803
        %863 = vmatprep.subr.mxu0 %v808
        %864 = vmatpush1.msra.mxu0 %v807
        %865 = vmatprep.subr.mxu0 %v812
        %866 = vmatpush1.msra.mxu0 %v811
        %867 = vmatprep.subr.mxu0 %v816
        %868 = vmatpush1.msra.mxu0 %v815
        %869 = vmatprep.subr.mxu0 %v820
        %870 = vmatpush1.msra.mxu0 %v819
        %871 = vmatprep.subr.mxu0 %v824
        %872 = vmatpush1.msra.mxu0 %v823
        %873 = vmatprep.subr.mxu0 %v828
        %874 = vmatpush1.msra.mxu0 %v827
        %875 = vmatprep.subr.mxu0 %v832
        %876 = vmatpush1.msra.mxu0 %v831
        %877 = vmatprep.subr.mxu0 %v836
        %878 = vmatpush1.msra.mxu0 %v835
        %879 = vmatprep.subr.mxu0 %v840
        %880 = vmatpush1.msra.mxu0 %v839
        %881 = vmatprep.subr.mxu0 %v844
        %882 = vmatpush1.msra.mxu0 %v843
        %883 = vmatprep.subr.mxu0 %v848
        %884 = vmatpush1.msra.mxu0 %v847
        %885 = vmatprep.subr.mxu0 %v852
        %886 = vmatpush1.msra.mxu0 %v851
        %887 = vmatprep.subr.mxu0 0.0
        %888 = vmatpush1.msra.mxu0 0.0
        %889 = vmatprep.subr.mxu0 0.0
        %890 = vmatpush1.msra.mxu0 0.0
        %891 = vmatprep.subr.mxu0 0.0
        %892 = vmatpush1.msra.mxu0 0.0
        %893 = vmatprep.subr.mxu0 0.0
        %894 = vmatpush1.msra.mxu0 0.0
        %895 = vmatprep.subr.mxu0 0.0
        %896 = vmatpush1.msra.mxu0 0.0
        %897 = vmatprep.subr.mxu0 0.0
        %898 = vmatpush1.msra.mxu0 0.0
        %899 = vmatprep.subr.mxu0 0.0
        %900 = vmatpush1.msra.mxu0 0.0
        %901 = vmatprep.subr.mxu0 0.0
        %902 = vmatpush1.msra.mxu0 0.0
        %903 = vmatprep.subr.mxu0 0.0
        %904 = vmatpush1.msra.mxu0 0.0
        %905 = vmatprep.subr.mxu0 0.0
        %906 = vmatpush1.msra.mxu0 0.0
        %907 = vmatprep.subr.mxu0 0.0
        %908 = vmatpush1.msra.mxu0 0.0
        %909 = vmatprep.subr.mxu0 0.0
        %910 = vmatpush1.msra.mxu0 0.0
        %911 = vmatprep.subr.mxu0 0.0
        %912 = vmatpush1.msra.mxu0 0.0
        %913 = vmatprep.subr.mxu0 0.0
        %914 = vmatpush1.msra.mxu0 0.0
        %915 = vmatprep.subr.mxu0 0.0
        %916 = vmatpush1.msra.mxu0 0.0
        %917 = vmatprep.subr.mxu0 0.0
        %918 = vmatpush1.msra.mxu0 0.0
        %919 = vmatprep.mubr.f32.mxu0 0.0
        %920 = vmatmul.mubr.f32.gmra.mrb[0].mxu0 %v641
        %v921 = vpop.f32.mrb[0].mxu0
        %v922 = vadd.f32 0.0, %v921
        %v923 = vpop.f32.mrb[0].mxu0
        %v924 = vadd.f32 0.0, %v923
        %925 = vdwg.mxu0
        %926 = vmatprep.subr.mxu0 %v794
        %927 = vmatpush1.msra.mxu0 %v793
        %928 = vmatprep.subr.mxu0 %v798
        %929 = vmatpush1.msra.mxu0 %v797
        %930 = vmatprep.subr.mxu0 %v802
        %931 = vmatpush1.msra.mxu0 %v801
        %932 = vmatprep.subr.mxu0 %v806
        %933 = vmatpush1.msra.mxu0 %v805
        %934 = vmatprep.subr.mxu0 %v810
        %935 = vmatpush1.msra.mxu0 %v809
        %936 = vmatprep.subr.mxu0 %v814
        %937 = vmatpush1.msra.mxu0 %v813
        %938 = vmatprep.subr.mxu0 %v818
        %939 = vmatpush1.msra.mxu0 %v817
        %940 = vmatprep.subr.mxu0 %v822
        %941 = vmatpush1.msra.mxu0 %v821
        %942 = vmatprep.subr.mxu0 %v826
        %943 = vmatpush1.msra.mxu0 %v825
        %944 = vmatprep.subr.mxu0 %v830
        %945 = vmatpush1.msra.mxu0 %v829
        %946 = vmatprep.subr.mxu0 %v834
        %947 = vmatpush1.msra.mxu0 %v833
        %948 = vmatprep.subr.mxu0 %v838
        %949 = vmatpush1.msra.mxu0 %v837
        %950 = vmatprep.subr.mxu0 %v842
        %951 = vmatpush1.msra.mxu0 %v841
        %952 = vmatprep.subr.mxu0 %v846
        %953 = vmatpush1.msra.mxu0 %v845
        %954 = vmatprep.subr.mxu0 %v850
        %955 = vmatpush1.msra.mxu0 %v849
        %956 = vmatprep.subr.mxu0 %v854
        %957 = vmatpush1.msra.mxu0 %v853
        %958 = vmatprep.subr.mxu0 0.0
        %959 = vmatpush1.msra.mxu0 0.0
        %960 = vmatprep.subr.mxu0 0.0
        %961 = vmatpush1.msra.mxu0 0.0
        %962 = vmatprep.subr.mxu0 0.0
        %963 = vmatpush1.msra.mxu0 0.0
        %964 = vmatprep.subr.mxu0 0.0
        %965 = vmatpush1.msra.mxu0 0.0
        %966 = vmatprep.subr.mxu0 0.0
        %967 = vmatpush1.msra.mxu0 0.0
        %968 = vmatprep.subr.mxu0 0.0
        %969 = vmatpush1.msra.mxu0 0.0
        %970 = vmatprep.subr.mxu0 0.0
        %971 = vmatpush1.msra.mxu0 0.0
        %972 = vmatprep.subr.mxu0 0.0
        %973 = vmatpush1.msra.mxu0 0.0
        %974 = vmatprep.subr.mxu0 0.0
        %975 = vmatpush1.msra.mxu0 0.0
        %976 = vmatprep.subr.mxu0 0.0
        %977 = vmatpush1.msra.mxu0 0.0
        %978 = vmatprep.subr.mxu0 0.0
        %979 = vmatpush1.msra.mxu0 0.0
        %980 = vmatprep.subr.mxu0 0.0
        %981 = vmatpush1.msra.mxu0 0.0
        %982 = vmatprep.subr.mxu0 0.0
        %983 = vmatpush1.msra.mxu0 0.0
        %984 = vmatprep.subr.mxu0 0.0
        %985 = vmatpush1.msra.mxu0 0.0
        %986 = vmatprep.subr.mxu0 0.0
        %987 = vmatpush1.msra.mxu0 0.0
        %988 = vmatprep.subr.mxu0 0.0
        %989 = vmatpush1.msra.mxu0 0.0
        %990 = vmatprep.mubr.f32.mxu0 0.0
        %991 = vmatmul.mubr.f32.gmra.mrb[0].mxu0 %v641
        %v992 = vpop.f32.mrb[0].mxu0
        %v993 = vadd.f32 0.0, %v992
        %v994 = vpop.f32.mrb[0].mxu0
        %v995 = vadd.f32 0.0, %v994
        %996 = vdwg.mxu0
        %997 = vmatprep.subr.mxu0 %v728
        %998 = vmatpush1.msra.mxu0 %v727
        %999 = vmatprep.subr.mxu0 %v732
        %1000 = vmatpush1.msra.mxu0 %v731
        %1001 = vmatprep.subr.mxu0 %v736
        %1002 = vmatpush1.msra.mxu0 %v735
        %1003 = vmatprep.subr.mxu0 %v740
        %1004 = vmatpush1.msra.mxu0 %v739
        %1005 = vmatprep.subr.mxu0 %v744
        %1006 = vmatpush1.msra.mxu0 %v743
        %1007 = vmatprep.subr.mxu0 %v748
        %1008 = vmatpush1.msra.mxu0 %v747
        %1009 = vmatprep.subr.mxu0 %v752
        %1010 = vmatpush1.msra.mxu0 %v751
        %1011 = vmatprep.subr.mxu0 %v756
        %1012 = vmatpush1.msra.mxu0 %v755
        %1013 = vmatprep.subr.mxu0 %v760
        %1014 = vmatpush1.msra.mxu0 %v759
        %1015 = vmatprep.subr.mxu0 %v764
        %1016 = vmatpush1.msra.mxu0 %v763
        %1017 = vmatprep.subr.mxu0 %v768
        %1018 = vmatpush1.msra.mxu0 %v767
        %1019 = vmatprep.subr.mxu0 %v772
        %1020 = vmatpush1.msra.mxu0 %v771
        %1021 = vmatprep.subr.mxu0 %v776
        %1022 = vmatpush1.msra.mxu0 %v775
        %1023 = vmatprep.subr.mxu0 %v780
        %1024 = vmatpush1.msra.mxu0 %v779
        %1025 = vmatprep.subr.mxu0 %v784
        %1026 = vmatpush1.msra.mxu0 %v783
        %1027 = vmatprep.subr.mxu0 %v788
        %1028 = vmatpush1.msra.mxu0 %v787
        %1029 = vmatprep.subr.mxu0 0.0
        %1030 = vmatpush1.msra.mxu0 0.0
        %1031 = vmatprep.subr.mxu0 0.0
        %1032 = vmatpush1.msra.mxu0 0.0
        %1033 = vmatprep.subr.mxu0 0.0
        %1034 = vmatpush1.msra.mxu0 0.0
        %1035 = vmatprep.subr.mxu0 0.0
        %1036 = vmatpush1.msra.mxu0 0.0
        %1037 = vmatprep.subr.mxu0 0.0
        %1038 = vmatpush1.msra.mxu0 0.0
        %1039 = vmatprep.subr.mxu0 0.0
        %1040 = vmatpush1.msra.mxu0 0.0
        %1041 = vmatprep.subr.mxu0 0.0
        %1042 = vmatpush1.msra.mxu0 0.0
        %1043 = vmatprep.subr.mxu0 0.0
        %1044 = vmatpush1.msra.mxu0 0.0
        %1045 = vmatprep.subr.mxu0 0.0
        %1046 = vmatpush1.msra.mxu0 0.0
        %1047 = vmatprep.subr.mxu0 0.0
        %1048 = vmatpush1.msra.mxu0 0.0
        %1049 = vmatprep.subr.mxu0 0.0
        %1050 = vmatpush1.msra.mxu0 0.0
        %1051 = vmatprep.subr.mxu0 0.0
        %1052 = vmatpush1.msra.mxu0 0.0
        %1053 = vmatprep.subr.mxu0 0.0
        %1054 = vmatpush1.msra.mxu0 0.0
        %1055 = vmatprep.subr.mxu0 0.0
        %1056 = vmatpush1.msra.mxu0 0.0
        %1057 = vmatprep.subr.mxu0 0.0
        %1058 = vmatpush1.msra.mxu0 0.0
        %1059 = vmatprep.subr.mxu0 0.0
        %1060 = vmatpush1.msra.mxu0 0.0
        %1061 = vmatprep.mubr.f32.mxu0 0.0
        %1062 = vmatmul.mubr.f32.gmra.mrb[0].mxu0 %v726
        %v1063 = vpop.f32.mrb[0].mxu0
        %v1064 = vadd.f32 %v922, %v1063
        %v1065 = vpop.f32.mrb[0].mxu0
        %v1066 = vadd.f32 %v924, %v1065
        %1067 = vdwg.mxu0
        %1068 = vmatprep.subr.mxu0 %v730
        %1069 = vmatpush1.msra.mxu0 %v729
        %1070 = vmatprep.subr.mxu0 %v734
        %1071 = vmatpush1.msra.mxu0 %v733
        %1072 = vmatprep.subr.mxu0 %v738
        %1073 = vmatpush1.msra.mxu0 %v737
        %1074 = vmatprep.subr.mxu0 %v742
        %1075 = vmatpush1.msra.mxu0 %v741
        %1076 = vmatprep.subr.mxu0 %v746
        %1077 = vmatpush1.msra.mxu0 %v745
        %1078 = vmatprep.subr.mxu0 %v750
        %1079 = vmatpush1.msra.mxu0 %v749
        %1080 = vmatprep.subr.mxu0 %v754
        %1081 = vmatpush1.msra.mxu0 %v753
        %1082 = vmatprep.subr.mxu0 %v758
        %1083 = vmatpush1.msra.mxu0 %v757
        %1084 = vmatprep.subr.mxu0 %v762
        %1085 = vmatpush1.msra.mxu0 %v761
        %1086 = vmatprep.subr.mxu0 %v766
        %1087 = vmatpush1.msra.mxu0 %v765
        %1088 = vmatprep.subr.mxu0 %v770
        %1089 = vmatpush1.msra.mxu0 %v769
        %1090 = vmatprep.subr.mxu0 %v774
        %1091 = vmatpush1.msra.mxu0 %v773
        %1092 = vmatprep.subr.mxu0 %v778
        %1093 = vmatpush1.msra.mxu0 %v777
        %1094 = vmatprep.subr.mxu0 %v782
        %1095 = vmatpush1.msra.mxu0 %v781
        %1096 = vmatprep.subr.mxu0 %v786
        %1097 = vmatpush1.msra.mxu0 %v785
        %1098 = vmatprep.subr.mxu0 %v790
        %1099 = vmatpush1.msra.mxu0 %v789
        %1100 = vmatprep.subr.mxu0 0.0
        %1101 = vmatpush1.msra.mxu0 0.0
        %1102 = vmatprep.subr.mxu0 0.0
        %1103 = vmatpush1.msra.mxu0 0.0
        %1104 = vmatprep.subr.mxu0 0.0
        %1105 = vmatpush1.msra.mxu0 0.0
        %1106 = vmatprep.subr.mxu0 0.0
        %1107 = vmatpush1.msra.mxu0 0.0
        %1108 = vmatprep.subr.mxu0 0.0
        %1109 = vmatpush1.msra.mxu0 0.0
        %1110 = vmatprep.subr.mxu0 0.0
        %1111 = vmatpush1.msra.mxu0 0.0
        %1112 = vmatprep.subr.mxu0 0.0
        %1113 = vmatpush1.msra.mxu0 0.0
        %1114 = vmatprep.subr.mxu0 0.0
        %1115 = vmatpush1.msra.mxu0 0.0
        %1116 = vmatprep.subr.mxu0 0.0
        %1117 = vmatpush1.msra.mxu0 0.0
        %1118 = vmatprep.subr.mxu0 0.0
        %1119 = vmatpush1.msra.mxu0 0.0
        %1120 = vmatprep.subr.mxu0 0.0
        %1121 = vmatpush1.msra.mxu0 0.0
        %1122 = vmatprep.subr.mxu0 0.0
        %1123 = vmatpush1.msra.mxu0 0.0
        %1124 = vmatprep.subr.mxu0 0.0
        %1125 = vmatpush1.msra.mxu0 0.0
        %1126 = vmatprep.subr.mxu0 0.0
        %1127 = vmatpush1.msra.mxu0 0.0
        %1128 = vmatprep.subr.mxu0 0.0
        %1129 = vmatpush1.msra.mxu0 0.0
        %1130 = vmatprep.subr.mxu0 0.0
        %1131 = vmatpush1.msra.mxu0 0.0
        %1132 = vmatprep.mubr.f32.mxu0 0.0
        %1133 = vmatmul.mubr.f32.gmra.mrb[0].mxu0 %v726
        %v1134 = vpop.f32.mrb[0].mxu0
        %v1135 = vadd.f32 %v993, %v1134
        %v1136 = vpop.f32.mrb[0].mxu0
        %v1137 = vadd.f32 %v995, %v1136
        %1138 = vdwg.mxu0
        %v1139 = vld [vmem:[%s8] sm:$0xf]
        %v1141 = vlaneseq
        %v1142 = vshrl.u32 %v1141, 7
        %v1143 = vsub.s32 0, %v1142
        %v1144 = vrot.slane %v1139, %v1143
        %v1145 = vlaneseq
        %v1146 = vshrl.u32 %v1145, 7
        %v1147 = vsub.s32 1, %v1146
        %v1148 = vrot.slane %v1139, %v1147
        %v1149 = vlaneseq
        %v1150 = vshrl.u32 %v1149, 7
        %v1151 = vsub.s32 2, %v1150
        %v1152 = vrot.slane %v1139, %v1151
        %v1153 = vlaneseq
        %v1154 = vshrl.u32 %v1153, 7
        %v1155 = vsub.s32 3, %v1154
        %v1156 = vrot.slane %v1139, %v1155
        %v1161 = vadd.f32 %v1064, %v1144
        %v1162 = vadd.f32 %v1066, %v1148
        %v1163 = vadd.f32 %v1135, %v1152
        %v1164 = vadd.f32 %v1137, %v1156
        %v1165 = vxor.u32 %v1161, 2147483648
        %v1166 = vmul.f32 %v1165, 1.442695
        %v1167 = vpow.pop %v1166
        %v1168 = vadd.f32 %v1167, 1.0
        %v1169 = vrcp.pop %v1168
        %v1170 = vmul.f32 1.0, %v1169
        %v1171 = vxor.u32 %v1162, 2147483648
        %v1172 = vmul.f32 %v1171, 1.442695
        %v1173 = vpow.pop %v1172
        %v1174 = vadd.f32 %v1173, 1.0
        %v1175 = vrcp.pop %v1174
        %v1176 = vmul.f32 1.0, %v1175
        %v1177 = vtanh.pop %v1163
        %v1178 = vxor.u32 %v1164, 2147483648
        %v1179 = vmul.f32 %v1178, 1.442695
        %v1180 = vpow.pop %v1179
        %v1181 = vadd.f32 %v1180, 1.0
        %v1182 = vrcp.pop %v1181
        %v1183 = vmul.f32 1.0, %v1182
        %v1184 = vmul.f32 %v1176, %v642
        %v1185 = vmul.f32 %v1170, %v1177
        %v1186 = vadd.f32 %v1184, %v1185
        %v1187 = vtanh.pop %v1186
        %v1188 = vmul.f32 %v1183, %v1187
        %v1189 = vld [vmem:[#allocation14] sm:$0xff]
        %v1190 = vld [vmem:[#allocation14 + $0x8] sm:$0xff]
        %v1191 = vld [vmem:[#allocation14 + $0x10] sm:$0xff]
        %v1192 = vld [vmem:[#allocation14 + $0x18] sm:$0xff]
        %v1193 = vld [vmem:[#allocation14 + $0x20] sm:$0xff]
        %v1194 = vld [vmem:[#allocation14 + $0x28] sm:$0xff]
        %v1195 = vld [vmem:[#allocation14 + $0x30] sm:$0xff]
        %v1196 = vld [vmem:[#allocation14 + $0x38] sm:$0xff]
        %v1197 = vld [vmem:[#allocation14 + $0x40] sm:$0xff]
        %v1198 = vld [vmem:[#allocation14 + $0x48] sm:$0xff]
        %v1199 = vld [vmem:[#allocation14 + $0x50] sm:$0xff]
        %v1200 = vld [vmem:[#allocation14 + $0x58] sm:$0xff]
        %v1201 = vld [vmem:[#allocation14 + $0x60] sm:$0xff]
        %v1202 = vld [vmem:[#allocation14 + $0x68] sm:$0xff]
        %v1203 = vld [vmem:[#allocation14 + $0x70] sm:$0xff]
        %v1204 = vld [vmem:[#allocation14 + $0x78] sm:$0xff]
        %v1205 = vld [vmem:[%s10] sm:$0x1]
        %v1207 = vlaneseq
        %v1208 = vshrl.u32 %v1207, 7
        %v1209 = vsub.s32 0, %v1208
        %v1210 = vrot.slane %v1205, %v1209
        %1212 = vmatprep.subr.mxu0 0.0
        %1213 = vmatpush1.msra.mxu0 %v1189
        %1214 = vmatprep.subr.mxu0 0.0
        %1215 = vmatpush1.msra.mxu0 %v1190
        %1216 = vmatprep.subr.mxu0 0.0
        %1217 = vmatpush1.msra.mxu0 %v1191
        %1218 = vmatprep.subr.mxu0 0.0
        %1219 = vmatpush1.msra.mxu0 %v1192
        %1220 = vmatprep.subr.mxu0 0.0
        %1221 = vmatpush1.msra.mxu0 %v1193
        %1222 = vmatprep.subr.mxu0 0.0
        %1223 = vmatpush1.msra.mxu0 %v1194
        %1224 = vmatprep.subr.mxu0 0.0
        %1225 = vmatpush1.msra.mxu0 %v1195
        %1226 = vmatprep.subr.mxu0 0.0
        %1227 = vmatpush1.msra.mxu0 %v1196
        %1228 = vmatprep.subr.mxu0 0.0
        %1229 = vmatpush1.msra.mxu0 %v1197
        %1230 = vmatprep.subr.mxu0 0.0
        %1231 = vmatpush1.msra.mxu0 %v1198
        %1232 = vmatprep.subr.mxu0 0.0
        %1233 = vmatpush1.msra.mxu0 %v1199
        %1234 = vmatprep.subr.mxu0 0.0
        %1235 = vmatpush1.msra.mxu0 %v1200
        %1236 = vmatprep.subr.mxu0 0.0
        %1237 = vmatpush1.msra.mxu0 %v1201
        %1238 = vmatprep.subr.mxu0 0.0
        %1239 = vmatpush1.msra.mxu0 %v1202
        %1240 = vmatprep.subr.mxu0 0.0
        %1241 = vmatpush1.msra.mxu0 %v1203
        %1242 = vmatprep.subr.mxu0 0.0
        %1243 = vmatpush1.msra.mxu0 %v1204
        %1244 = vmatprep.subr.mxu0 0.0
        %1245 = vmatpush1.msra.mxu0 0.0
        %1246 = vmatprep.subr.mxu0 0.0
        %1247 = vmatpush1.msra.mxu0 0.0
        %1248 = vmatprep.subr.mxu0 0.0
        %1249 = vmatpush1.msra.mxu0 0.0
        %1250 = vmatprep.subr.mxu0 0.0
        %1251 = vmatpush1.msra.mxu0 0.0
        %1252 = vmatprep.subr.mxu0 0.0
        %1253 = vmatpush1.msra.mxu0 0.0
        %1254 = vmatprep.subr.mxu0 0.0
        %1255 = vmatpush1.msra.mxu0 0.0
        %1256 = vmatprep.subr.mxu0 0.0
        %1257 = vmatpush1.msra.mxu0 0.0
        %1258 = vmatprep.subr.mxu0 0.0
        %1259 = vmatpush1.msra.mxu0 0.0
        %1260 = vmatprep.subr.mxu0 0.0
        %1261 = vmatpush1.msra.mxu0 0.0
        %1262 = vmatprep.subr.mxu0 0.0
        %1263 = vmatpush1.msra.mxu0 0.0
        %1264 = vmatprep.subr.mxu0 0.0
        %1265 = vmatpush1.msra.mxu0 0.0
        %1266 = vmatprep.subr.mxu0 0.0
        %1267 = vmatpush1.msra.mxu0 0.0
        %1268 = vmatprep.subr.mxu0 0.0
        %1269 = vmatpush1.msra.mxu0 0.0
        %1270 = vmatprep.subr.mxu0 0.0
        %1271 = vmatpush1.msra.mxu0 0.0
        %1272 = vmatprep.subr.mxu0 0.0
        %1273 = vmatpush1.msra.mxu0 0.0
        %1274 = vmatprep.subr.mxu0 0.0
        %1275 = vmatpush1.msra.mxu0 0.0
        %1276 = vmatprep.mubr.f32.mxu0 0.0
        %1277 = vmatmul.mubr.f32.gmra.mrb[0].mxu0 %v1188
        %v1278 = vpop.f32.mrb[0].mxu0
        %v1279 = vadd.f32 %v1210, %v1278
        %v1280 = vpop.f32.mrb[0].mxu0
        %1281 = vdwg.mxu0
        %v1282 = vlaneseq
        %v1283 = vand.u32 %v1282, 127
        %vm1284 = vcmp.lt.s32.totalorder %v1283, 8
        %v1285 = vsel %vm1284, %v1279, -1e+30
        %vm1286 = vcmp.eq.s32.totalorder %v1283, 8
        %v1287 = vsel %vm1286, %v1279, 0.0
        %1288 = vadd.xlane.f32.xlu0 %v1287
        %v1289 = vpop.xlane.xlu0 %1288
        %1290 = vmax.xlane.f32.xlu0 %v1285
        %v1291 = vpop.xlane.xlu0 %1290
        %v1292 = vsub.f32 %v1285, %v1291
        %v1293 = vmul.f32 %v1292, 1.442695
        %v1294 = vpow.pop %v1293
        %1295 = vadd.xlane.f32.xlu0 %v1294
        %v1296 = vpop.xlane.xlu0 %1295
        %v1297 = vrcp.pop %v1296
        %v1298 = vmul.f32 %v1294, %v1297
        %v1299 = vlog2.pop %v1296
        %v1300 = vmul.f32 %v1299, 0.6931472
        %v1301 = vsub.f32 %v1292, %v1300
        %v1302 = vmax.f32 %v1301, -3.4028235e+38
        %v1303 = vld [vmem:[%s556] sm:$0xff]
        %v1304 = vadd.f32 %v1285, %v1303
        %1305 = vmax.xlane.f32.xlu0 %v1304
        %v1306 = vpop.xlane.xlu0 %1305
        %vm1307 = vcmp.ge.f32.partialorder %v1304, %v1306
        %v1308 = vsel %vm1307, %v1283, 8
        %v1309 = vand.u32 %v1308, 65535
        %v1310 = vshra.s32 %v1308, 16
        %v1311 = vcvt.s32.f32 %v1309
        %v1312 = vcvt.s32.f32 %v1310
        %1313 = vmin.xlane.f32.xlu0 %v1312
        %v1314 = vpop.xlane.xlu0 %1313
        %vm1315 = vcmp.eq.f32.partialorder %v1312, %v1314
        %v1316 = vsel %vm1315, %v1311, inf
        %1317 = vmin.xlane.f32.xlu0 %v1316
        %v1318 = vpop.xlane.xlu0 %1317
        %v1319 = vcvt.f32.s32 %v1318
        %v1320 = vcvt.f32.s32 %v1314
        %v1321 = vshll.u32 %v1320, 16
        %v1322 = vadd.s32 %v1321, %v1319
        %vm1323 = vcmp.eq.s32.totalorder %v1283, %v1322
        %v1324 = vsel %vm1323, %v1302, -1e+30
        %1325 = vmax.xlane.f32.xlu0 %v1324
        %v1326 = vpop.xlane.xlu0 %1325
        %v1327 = vmul.f32 %v1298, %v1302
        %1328 = vadd.xlane.f32.xlu0 %v1327
        %v1329 = vpop.xlane.xlu0 %1328
        %v1330 = vsub.f32 0.0, %v1329
        %vm1331 = vcmp.eq.s32.totalorder %v1283, 0
        %v1332 = vcvt.s32.f32 %v1322
        %vm1333 = vcmp.eq.s32.totalorder %v1283, 1
        %vm1334 = vcmp.eq.s32.totalorder %v1283, 2
        %v1335 = vsel %vm1334, %v1330, %v1289
        %v1336 = vsel %vm1333, %v1326, %v1335
        %v1337 = vsel %vm1331, %v1332, %v1336
        %1338 = vst [vmem:[%s625] sm:$0xff] %v1337
        %1339 = vst [vmem:[%s632] sm:$0xff] %v1188
        %1340 = vst [vmem:[%s639] sm:$0xff] %v1186
        %s1341 = sand.u32 %s301, 1
        %s1342 = scalar_lea.sflag [#allocation4], %s1341
        %s1343 = sand.u32 %s301, 1
        %s1344 = smul.addr %s1343, 8
        %s1345 = scalar_lea.vmem [#allocation16], %s1344
        %s1346 = sand.u32 %s42, 1
        %s1347 = scalar_lea.sflag [#allocation18], %s1346
        %s1348 = sand.u32 %s327, 1
        %s1349 = smul.addr %s1348, 8
        %s1350 = scalar_lea.vmem [#allocation17], %s1349
        %s1351 = sand.u32 %s42, 1
        %s1352 = scalar_lea.sflag [#allocation18], %s1351
        %s1353 = sand.u32 %s353, 1
        %s1354 = smul.addr %s1353, 8
        %s1355 = scalar_lea.vmem [#allocation19], %s1354
        // Predicated region
        $region97: #{tpu_custom_call.1} parent=63 // pred_check
          %p1356 = pneg %p311
        $region98: #{tpu_custom_call.1} parent=63 // pred_check_branch
          %1358 = sbr.rel (%p1356) target = $region100
        $region99: #{tpu_custom_call.1} parent=63 // pred_region
          %s1360 = ssub.s32 128, 128
          %1361 = vsyncadd %s1342, %s1360
          %s1362 = smul.addr %s42, 128
          %s1363 = scalar_lea.hbm %s11, %s1362
          %s1365 = sshll.u32 %s1345, 4
          %s1366 = int_to_ptr.vmem [resolvable:$true] %s1365
          %1368 = dma.vmem_to_hbm [thread:$0]  %s1366, 128, %s1363, %s1342
        $region100: #{tpu_custom_call.1} parent=63 // pred_fallthru
          _
        // Predicated region
        $region101: #{tpu_custom_call.1} parent=63 // pred_check
          %p1369 = pneg %p337
        $region102: #{tpu_custom_call.1} parent=63 // pred_check_branch
          %1371 = sbr.rel (%p1369) target = $region104
        $region103: #{tpu_custom_call.1} parent=63 // pred_region
          %s1373 = ssub.s32 128, 128
          %1374 = vsyncadd %s1347, %s1373
          %s1375 = smul.addr %s42, 128
          %s1376 = scalar_lea.hbm %s12, %s1375
          %s1378 = sshll.u32 %s1350, 4
          %s1379 = int_to_ptr.vmem [resolvable:$true] %s1378
          %1381 = dma.vmem_to_hbm [thread:$0]  %s1379, 128, %s1376, %s1347
        $region104: #{tpu_custom_call.1} parent=63 // pred_fallthru
          _
        // Predicated region
        $region105: #{tpu_custom_call.1} parent=63 // pred_check
          %p1382 = pneg %p363
        $region106: #{tpu_custom_call.1} parent=63 // pred_check_branch
          %1384 = sbr.rel (%p1382) target = $region108
        $region107: #{tpu_custom_call.1} parent=63 // pred_region
          %s1386 = ssub.s32 128, 128
          %1387 = vsyncadd %s1352, %s1386
          %s1388 = smul.addr %s42, 128
          %s1389 = scalar_lea.hbm %s13, %s1388
          %s1391 = sshll.u32 %s1355, 4
          %s1392 = int_to_ptr.vmem [resolvable:$true] %s1391
          %1394 = dma.vmem_to_hbm [thread:$0]  %s1392, 128, %s1389, %s1352
        $region108: #{tpu_custom_call.1} parent=63 // pred_fallthru
          _
      $region64: #{tpu_custom_call.1} parent=5 // pred_fallthru
        _
      %p1395 = scmp.le.s32.totalorder 2, %s37
      // Predicated region
      $region109: #{tpu_custom_call.1} parent=5 // pred_check
        %p1396 = pneg %p1395
      $region110: #{tpu_custom_call.1} parent=5 // pred_check_branch
        %1398 = sbr.rel (%p1396) target = $region112
      $region111: #{tpu_custom_call.1} parent=5 // pred_region
        %s1399 = ssub.s32 %s37, 2
        // Predicated region
        $region113: #{tpu_custom_call.1} parent=111 // pred_check
          %p1400 = pneg %p317
        $region114: #{tpu_custom_call.1} parent=111 // pred_check_branch
          %1402 = sbr.rel (%p1400) target = $region116
        $region115: #{tpu_custom_call.1} parent=111 // pred_region
          %s1403 = sand.u32 %s302, 1
          %s1404 = scalar_lea.sflag [#allocation4], %s1403
          %s1405 = sand.u32 %s302, 1
          %s1406 = smul.addr %s1405, 8
          %s1407 = scalar_lea.vmem [#allocation16], %s1406
          %1408 = dma.done %s1404, 128
        $region116: #{tpu_custom_call.1} parent=111 // pred_fallthru
          _
        // Predicated region
        $region117: #{tpu_custom_call.1} parent=111 // pred_check
          %p1409 = pneg %p343
        $region118: #{tpu_custom_call.1} parent=111 // pred_check_branch
          %1411 = sbr.rel (%p1409) target = $region120
        $region119: #{tpu_custom_call.1} parent=111 // pred_region
          %s1412 = sand.u32 %s43, 1
          %s1413 = scalar_lea.sflag [#allocation18], %s1412
          %s1414 = sand.u32 %s328, 1
          %s1415 = smul.addr %s1414, 8
          %s1416 = scalar_lea.vmem [#allocation17], %s1415
          %1417 = dma.done %s1413, 128
        $region120: #{tpu_custom_call.1} parent=111 // pred_fallthru
          _
        // Predicated region
        $region121: #{tpu_custom_call.1} parent=111 // pred_check
          %p1418 = pneg %p369
        $region122: #{tpu_custom_call.1} parent=111 // pred_check_branch
          %1420 = sbr.rel (%p1418) target = $region124
        $region123: #{tpu_custom_call.1} parent=111 // pred_region
          %s1421 = sand.u32 %s43, 1
          %s1422 = scalar_lea.sflag [#allocation18], %s1421
          %s1423 = sand.u32 %s354, 1
          %s1424 = smul.addr %s1423, 8
          %s1425 = scalar_lea.vmem [#allocation19], %s1424
          %1426 = dma.done %s1422, 128
        $region124: #{tpu_custom_call.1} parent=111 // pred_fallthru
          _
      $region112: #{tpu_custom_call.1} parent=5 // pred_fallthru
        _
    $region6: #{tpu_custom_call.1} parent=1 // loop_footer
      %s41 = sadd.s32 1, %s37
    $region7: #{tpu_custom_call.1} parent=1 // loop_footer_branch
      %36 = sbr.rel target = $region3
    $region8: #{tpu_custom_call.1} parent=1 // loop_exit
      _
    %1427 = vsyncpa [#allocation3], 1
    %s1428 = scalar_lea.sflag [#allocation3], 1
    %1429 = vsyncpa %s1428, 1
    %1430 = vsyncpa [#allocation6], 1
    %s1431 = scalar_lea.sflag [#allocation6], 1
    %1432 = vsyncpa %s1431, 1
    %1433 = vsyncpa [#allocation9], 1
    %s1434 = scalar_lea.sflag [#allocation9], 1
    %1435 = vsyncpa %s1434, 1
    %1436 = vsyncpa [#allocation12], 1
    %1437 = vsyncpa [#allocation15], 1
    %1438 = vsyncpa [#allocation4], 1
    %s1439 = scalar_lea.sflag [#allocation4], 1
    %1440 = vsyncpa %s1439, 1
    %1441 = vsyncpa [#allocation18], 1
    %s1442 = scalar_lea.sflag [#allocation18], 1
    %1443 = vsyncpa %s1442, 1

</llo_original>
